<compile_context>
chip_gen: v7x
topology: tpu7x:2x2x1
jax: 0.10.0
libtpu: 0.0.40
codegen_flags: <defaults>
</compile_context>

<pallas_src>
import jax
import jax.numpy as jnp
from jax.experimental import pallas as pl
from jax.experimental.pallas import tpu as pltpu


MATMUL_WEIGHT_KEYS = ("wq", "wk", "wv", "wout", "w1", "w2", "wlm")

_MIB = 1024 * 1024


def _tpu_vmem_capacity_bytes():
    """Physical VMEM per TensorCore; falls back to 128 MiB if the query fails."""
    try:
        return int(pltpu.get_tpu_info().vmem_capacity_bytes)
    except Exception:
        return 128 * _MIB


def _vmem_limit_bytes(cap):
    # ~62% of physical VMEM: ~40 MiB on v7x (64 MiB parts), ~80 MiB on v5e/v6e (128 MiB).
    return int(min(96 * _MIB, max(32 * _MIB, (cap * 5) // 8)))


def _invariant_spec(shape, index_map):
    """BlockSpec for a grid-invariant operand (constant index_map).

    Single-buffered when this jax exposes BlockSpec(pipeline_mode=...): the block is
    never re-fetched, so double-buffering it would only burn VMEM.
    """
    buffered = getattr(pl, "Buffered", None)
    if buffered is not None:
        try:
            return pl.BlockSpec(shape, index_map, pipeline_mode=buffered(1))
        except TypeError:
            pass
    return pl.BlockSpec(shape, index_map)


def _layer_norm(y, g, b, eps=1e-5):
    mu = jnp.mean(y, axis=-1, keepdims=True)
    var = jnp.mean((y - mu) ** 2, axis=-1, keepdims=True)
    return (y - mu) * jax.lax.rsqrt(var + eps) * g + b


def _make_backbone_kernel(fused_qkv):
    def kernel(x_ref, *refs):
        if fused_qkv:
            (wqkv_ref, wout_ref, bout_ref, g1_ref, be1_ref,
             w1_ref, b1_ref, w2_ref, b2_ref, g2_ref, be2_ref, out_ref) = refs
            cdt = wqkv_ref.dtype                 # MXU input dtype (f32 or bf16)
            H = wqkv_ref.shape[1] // 3
        else:
            (wq_ref, wk_ref, wv_ref, wout_ref, bout_ref, g1_ref, be1_ref,
             w1_ref, b1_ref, w2_ref, b2_ref, g2_ref, be2_ref, out_ref) = refs
            cdt = wq_ref.dtype
            H = wq_ref.shape[1]

        Bt, T, E = x_ref.shape
        scale = jnp.float32(E) ** -0.5           # reference scales by embed_dim**-0.5
        # Exact reciprocal for the f32 verification build; EUP approx for bf16 deploy.
        approx_recip = (cdt != jnp.float32)

        x = x_ref[...].astype(jnp.float32)       # (Bt, T, E)
        xr = x.reshape(Bt * T, E).astype(cdt)    # flatten rows -> large MXU M dim

        if fused_qkv:
            # H % 128 == 0: one (M, E)x(E, 3H) matmul; output slices are lane-aligned.
            qkv = jnp.dot(xr, wqkv_ref[...], preferred_element_type=jnp.float32)
            q = qkv[:, :H] * scale               # scale folded into q
            k = qkv[:, H:2 * H]
            v = qkv[:, 2 * H:]
        else:
            q = jnp.dot(xr, wq_ref[...], preferred_element_type=jnp.float32) * scale
            k = jnp.dot(xr, wk_ref[...], preferred_element_type=jnp.float32)
            v = jnp.dot(xr, wv_ref[...], preferred_element_type=jnp.float32)
        q = q.reshape(Bt, T, H)
        k = k.reshape(Bt, T, H)
        v = v.reshape(Bt, T, H)

        # Scores: contract the last dims directly (no explicit k transpose).
        wei = jnp.einsum("bqh,bkh->bqk", q.astype(cdt), k.astype(cdt),
                         preferred_element_type=jnp.float32)       # (Bt, T, T)
        # Causal mask from one 2-D comparison, broadcast over the batch dim (no
        # (Bt,T,T) int32 iota materialization).
        rows = jax.lax.broadcasted_iota(jnp.int32, (T, T), 0)
        cols = jax.lax.broadcasted_iota(jnp.int32, (T, T), 1)
        causal = (rows >= cols)[None, :, :]
        wei = jnp.where(causal, wei, jnp.float32(-1e30))           # finite fill (NaN-safe)
        wei = wei - jnp.max(wei, axis=-1, keepdims=True)
        p = jnp.exp(wei)
        inv_denom = pl.reciprocal(jnp.sum(p, axis=-1, keepdims=True),
                                  approx=approx_recip)
        p = p * inv_denom
        # TODO(synk): for long T, switch to a KV-tiled online-softmax (flash) loop so
        # the (Bt, T, T) score matrix is never materialized (needed for T>=~1k on v7x).

        attn = jnp.einsum("bqk,bkh->bqh", p.astype(cdt), v.astype(cdt),
                          preferred_element_type=jnp.float32)      # (Bt, T, H)
        xr = jnp.dot(attn.reshape(Bt * T, H).astype(cdt), wout_ref[...],
                     preferred_element_type=jnp.float32) + bout_ref[...]

        xr = _layer_norm(xr, g1_ref[...], be1_ref[...])

        h = jnp.dot(xr.astype(cdt), w1_ref[...],
                    preferred_element_type=jnp.float32) + b1_ref[...]
        h = jnp.maximum(h, 0.0)
        xr = jnp.dot(h.astype(cdt), w2_ref[...],
                     preferred_element_type=jnp.float32) + b2_ref[...]

        xr = _layer_norm(xr, g2_ref[...], be2_ref[...])
        out_ref[...] = xr.reshape(Bt, T, E).astype(out_ref.dtype)

    return kernel


def lm_head_kernel(x_ref, w_ref, b_ref, out_ref):
    # x is already stored in the same dtype as w (no per-tile cast); f32 accumulate.
    acc = jnp.dot(x_ref[...], w_ref[...], preferred_element_type=jnp.float32)
    out_ref[...] = (acc + b_ref[...]).astype(out_ref.dtype)


def gpt_forward(idx, params, logits_dtype=jnp.float32):
    B, T = idx.shape
    wte, wpe = params["wte"], params["wpe"]
    E = wte.shape[1]
    H = params["wq"].shape[1]
    wlm, blm = params["wlm"], params["blm"]
    V = wlm.shape[1]

    cap = _tpu_vmem_capacity_bytes()
    vmem_limit = _vmem_limit_bytes(cap)
    big_vmem = cap >= 96 * _MIB                   # 128 MiB parts (v5e/v6e) vs 64 MiB (v7x)

    # Glue: embedding gathers (data-dependent) stay in plain JAX.
    x = (jnp.take(wte, idx, axis=0) + wpe[:T][None, :, :]).astype(jnp.float32)

    # ---- stage 1: qkv/attention + ln1 + MLP + ln2, gridded over batch tiles --------
    rows_target = 512 if big_vmem else 256        # rows (Bt*T) per grid step
    Bt = min(B, max(1, rows_target // max(T, 1)))
    while B % Bt:
        Bt -= 1
    # Keep >= 2 grid steps when possible so the parallel axis can be split across the
    # two TensorCores on v7x.
    if B >= 2 and B // Bt < 2:
        Bt = max(d for d in range(1, B) if B % d == 0)

    fused_qkv = (H % 128 == 0)
    if fused_qkv:
        qkv_weights = [jnp.concatenate(
            [params["wq"], params["wk"], params["wv"]], axis=1)]
    else:
        # TODO(synk): pad H (and E) up to multiples of 128 so the fused, lane-aligned
        # qkv path / lane-dense stores apply for arbitrary model dims.
        qkv_weights = [params["wq"], params["wk"], params["wv"]]
    bw = qkv_weights + [params[k] for k in
                        ("wout", "bout", "g1", "be1", "w1", "b1", "w2", "b2",
                         "g2", "be2")]
    w_bytes = sum(int(w.size) * w.dtype.itemsize for w in bw)

    # Hidden activations round-trip HBM in the matmul-weight dtype (bf16 in the deploy
    # config): halves inter-kernel traffic and removes the per-vocab-tile cast.
    hidden_dtype = wlm.dtype

    backbone_cost = pl.CostEstimate(
        flops=int(2 * B * T * (3 * E * H + 2 * T * H + H * E + 8 * E * E)),
        transcendentals=int(B * T * T + 2 * B * T),
        bytes_accessed=int(B * T * E * (4 + jnp.dtype(hidden_dtype).itemsize) + w_bytes),
    )

    act_spec = pl.BlockSpec((Bt, T, E), lambda b: (b, 0, 0))
    # Grid-invariant weights: constant index_map (never re-fetched), single-buffered.
    weight_specs = [_invariant_spec(w.shape, lambda b: (0, 0)) for w in bw]

    hidden = pl.pallas_call(
        _make_backbone_kernel(fused_qkv),
        out_shape=jax.ShapeDtypeStruct((B, T, E), hidden_dtype),
        grid=(B // Bt,),
        in_specs=[act_spec] + weight_specs,
        out_specs=pl.BlockSpec((Bt, T, E), lambda b: (b, 0, 0)),
        compiler_params=pltpu.CompilerParams(
            dimension_semantics=("parallel",),
            vmem_limit_bytes=vmem_limit),
        cost_estimate=backbone_cost,
    )(x, *bw)

    # ---- stage 2: lm_head tiled over (row tiles, vocab tiles) ----------------------
    R = B * T
    xh = hidden.reshape(R, E)
    tile_r_max = 512 if big_vmem else 256
    tile_v_max = 4096 if big_vmem else 2048
    TILE_R = R if R <= tile_r_max else tile_r_max   # multiple of 8 or full dim
    TILE_V = V if V <= tile_v_max else tile_v_max   # lane-dense mult of 128 or full dim

    num_r = pl.cdiv(R, TILE_R)
    num_v = pl.cdiv(V, TILE_V)

    lm_cost = pl.CostEstimate(
        flops=int(2 * R * E * V),
        transcendentals=0,
        bytes_accessed=int(R * E * xh.dtype.itemsize
                           + int(wlm.size) * wlm.dtype.itemsize
                           + R * V * jnp.dtype(logits_dtype).itemsize),
    )

    # Pick the grid order that minimizes HBM re-streaming: rows-outer re-streams wlm
    # num_r times, vocab-outer re-streams x num_v times.
    wlm_stream = num_r * int(wlm.size) * wlm.dtype.itemsize
    x_stream = num_v * R * E * xh.dtype.itemsize
    if wlm_stream <= x_stream:
        grid = (num_r, num_v)
        x_spec = pl.BlockSpec((TILE_R, E), lambda r, v: (r, 0))
        w_spec = pl.BlockSpec((E, TILE_V), lambda r, v: (0, v))
        b_spec = pl.BlockSpec((1, TILE_V), lambda r, v: (0, v))
        o_spec = pl.BlockSpec((TILE_R, TILE_V), lambda r, v: (r, v))
    else:
        grid = (num_v, num_r)
        x_spec = pl.BlockSpec((TILE_R, E), lambda v, r: (r, 0))
        w_spec = pl.BlockSpec((E, TILE_V), lambda v, r: (0, v))
        b_spec = pl.BlockSpec((1, TILE_V), lambda v, r: (0, v))
        o_spec = pl.BlockSpec((TILE_R, TILE_V), lambda v, r: (r, v))

    # Both grid axes are fully independent (E is not gridded) -> parallel/parallel so
    # v7x can split the work across both TensorCores.
    logits = pl.pallas_call(
        lm_head_kernel,
        out_shape=jax.ShapeDtypeStruct((R, V), logits_dtype),
        grid=grid,
        in_specs=[x_spec, w_spec, b_spec],
        out_specs=o_spec,
        compiler_params=pltpu.CompilerParams(
            dimension_semantics=("parallel", "parallel"),
            vmem_limit_bytes=vmem_limit),
        cost_estimate=lm_cost,
    )(xh, wlm, blm)
    # TODO(synk): on v7x store wlm in fp8 (per-column scale applied after the f32
    # accumulate) to halve the dominant weight stream; pass logits_dtype=jnp.bfloat16
    # when the downstream loss tolerates it to halve logits writeback.

    return logits.reshape(B, T, V)


def init_params(key, vocab_size, embed_dim, max_seq_len, head_size):
    ks = jax.random.split(key, 13)

    def linear_w(k, fan_in, fan_out):
        bound = 1.0 / (fan_in ** 0.5)
        return jax.random.uniform(k, (fan_in, fan_out), jnp.float32, -bound, bound)

    def linear_b(k, fan_in, fan_out):
        bound = 1.0 / (fan_in ** 0.5)
        return jax.random.uniform(k, (1, fan_out), jnp.float32, -bound, bound)

    return {
        "wte": jax.random.normal(ks[0], (vocab_size, embed_dim), jnp.float32),
        "wpe": jax.random.normal(ks[1], (max_seq_len, embed_dim), jnp.float32),
        # SelfAttention (qkv linear has bias=False; stored pre-split as wq/wk/wv)
        "wq": linear_w(ks[2], embed_dim, head_size),
        "wk": linear_w(ks[3], embed_dim, head_size),
        "wv": linear_w(ks[4], embed_dim, head_size),
        "wout": linear_w(ks[5], head_size, embed_dim),
        "bout": linear_b(ks[6], head_size, embed_dim),
        # LayerNorm 1 (PyTorch default: gamma=1, beta=0)
        "g1": jnp.ones((1, embed_dim), jnp.float32),
        "be1": jnp.zeros((1, embed_dim), jnp.float32),
        # MLP
        "w1": linear_w(ks[7], embed_dim, 4 * embed_dim),
        "b1": linear_b(ks[8], embed_dim, 4 * embed_dim),
        "w2": linear_w(ks[9], 4 * embed_dim, embed_dim),
        "b2": linear_b(ks[10], 4 * embed_dim, embed_dim),
        # LayerNorm 2
        "g2": jnp.ones((1, embed_dim), jnp.float32),
        "be2": jnp.zeros((1, embed_dim), jnp.float32),
        # lm_head
        "wlm": linear_w(ks[11], embed_dim, vocab_size),
        "blm": linear_b(ks[12], embed_dim, vocab_size),
    }


def cast_matmul_weights(params, dtype):
    """Store the large matmul weights in `dtype` (e.g. bf16); keep biases/LN params f32."""
    return {k: (v.astype(dtype) if k in MATMUL_WEIGHT_KEYS else v)
            for k, v in params.items()}


def gpt_reference(idx, params):
    """Pure-JAX f32 reference mirroring the PyTorch forward, using the same stored weights."""
    B, T = idx.shape
    E = params["wte"].shape[1]
    f32 = jnp.float32
    w = lambda name: params[name].astype(f32)

    x = (jnp.take(params["wte"], idx, axis=0) + params["wpe"][:T][None]).astype(f32)
    q = x @ w("wq")
    k = x @ w("wk")
    v = x @ w("wv")
    wei = jnp.einsum("bqh,bkh->bqk", q, k) * (E ** -0.5)
    mask = jnp.tril(jnp.ones((T, T), bool))
    wei = jnp.where(mask[None], wei, -jnp.inf)
    wei = jax.nn.softmax(wei, axis=-1)
    x = jnp.einsum("bqk,bkh->bqh", wei, v) @ w("wout") + params["bout"]

    def ln(y, g, b, eps=1e-5):
        mu = jnp.mean(y, -1, keepdims=True)
        var = jnp.mean((y - mu) ** 2, -1, keepdims=True)
        return (y - mu) / jnp.sqrt(var + eps) * g + b

    x = ln(x, params["g1"], params["be1"])
    x = jnp.maximum(x @ w("w1") + params["b1"], 0.0) @ w("w2") + params["b2"]
    x = ln(x, params["g2"], params["be2"])
    return x @ w("wlm") + params["blm"]


if __name__ == "__main__":
    vocab_size, embed_dim, max_seq_len, head_size = 64, 32, 16, 16
    B, T = 2, 8

    key = jax.random.PRNGKey(0)
    pkey, ikey = jax.random.split(key)
    params = init_params(pkey, vocab_size, embed_dim, max_seq_len, head_size)
    idx = jax.random.randint(ikey, (B, T), 0, vocab_size, dtype=jnp.int32)

    fwd = jax.jit(gpt_forward)

    # f32 matmul weights: tight check against the pure-JAX reference.
    logits = jax.block_until_ready(fwd(idx, params))
    ref = gpt_reference(idx, params)
    assert logits.shape == (B, T, vocab_size)
    assert bool(jnp.all(jnp.isfinite(logits)))
    assert jnp.allclose(logits, ref, rtol=1e-3, atol=1e-3), "f32 mismatch vs reference"

    # bf16 matmul weights (recommended deployment config: halves weight-DMA and hidden
    # round-trip bytes, doubles MXU throughput); f32 accumulation — loose check.
    params_bf16 = cast_matmul_weights(params, jnp.bfloat16)
    logits_bf16 = jax.block_until_ready(fwd(idx, params_bf16))
    ref_bf16 = gpt_reference(idx, params_bf16)
    assert bool(jnp.all(jnp.isfinite(logits_bf16)))
    assert jnp.allclose(logits_bf16, ref_bf16, rtol=1e-1, atol=1e-1), "bf16 mismatch vs reference"

    print("KERNEL_OK")
</pallas_src>

<mosaic_0001>
module attributes {stable_mosaic.version = 11 : i64} {
  func.func @lm_head_kernel(%arg0: i32, %arg1: i32, %arg2: memref<16x32xf32, #tpu.memory_space<vmem>>, %arg3: memref<32x64xf32, #tpu.memory_space<vmem>>, %arg4: memref<1x64xf32, #tpu.memory_space<vmem>>, %arg5: memref<16x64xf32, #tpu.memory_space<vmem>>) attributes {dimension_semantics = [#tpu.dimension_semantics<parallel>, #tpu.dimension_semantics<parallel>], iteration_bounds = array<i64: 1, 1>, scalar_prefetch = 0 : i64, scratch_operands = 0 : i64, tpu.core_type = #tpu.core_type<tc>, window_params = [{transform_indices = @transform_0, window_bounds = array<i64: 16, 32>}, {transform_indices = @transform_1, window_bounds = array<i64: 32, 64>}, {transform_indices = @transform_2, window_bounds = array<i64: 1, 64>}, {transform_indices = @transform_3, window_bounds = array<i64: 16, 64>}]} {
    %c0 = arith.constant 0 : index
    %c0_0 = arith.constant 0 : index
    %0 = vector.load %arg2[%c0, %c0_0] : memref<16x32xf32, #tpu.memory_space<vmem>>, vector<16x32xf32>
    %c0_1 = arith.constant 0 : index
    %c0_2 = arith.constant 0 : index
    %1 = vector.load %arg3[%c0_1, %c0_2] : memref<32x64xf32, #tpu.memory_space<vmem>>, vector<32x64xf32>
    %cst = arith.constant dense<0.000000e+00> : vector<16x64xf32>
    %2 = tpu.matmul %0, %1, %cst {dimension_numbers = #tpu.dot_dimension_numbers<[1], [0], [0], [1], [0, 0, 1, 1], [], []>} : vector<16x32xf32>, vector<32x64xf32>, vector<16x64xf32> -> vector<16x64xf32>
    %c0_3 = arith.constant 0 : index
    %c0_4 = arith.constant 0 : index
    %3 = vector.load %arg4[%c0_3, %c0_4] : memref<1x64xf32, #tpu.memory_space<vmem>>, vector<1x64xf32>
    %4 = vector.broadcast %3 : vector<1x64xf32> to vector<16x64xf32>
    %5 = arith.addf %2, %4 : vector<16x64xf32>
    %c0_5 = arith.constant 0 : index
    %c0_6 = arith.constant 0 : index
    %6 = vector.load %arg5[%c0_5, %c0_6] : memref<16x64xf32, #tpu.memory_space<vmem>>, vector<16x64xf32>
    tpu.vector_store %arg5[%c0_5, %c0_6], %5 {strides = array<i32>} : memref<16x64xf32, #tpu.memory_space<vmem>>, vector<16x64xf32>,
    return
  }
  func.func @transform_0(%arg0: i32, %arg1: i32) -> (i32, i32) {
    %c0_i32 = arith.constant 0 : i32
    %c0_i32_0 = arith.constant 0 : i32
    return %arg1, %c0_i32 : i32, i32
  }
  func.func @transform_1(%arg0: i32, %arg1: i32) -> (i32, i32) {
    %c0_i32 = arith.constant 0 : i32
    %c0_i32_0 = arith.constant 0 : i32
    return %c0_i32, %arg0 : i32, i32
  }
  func.func @transform_2(%arg0: i32, %arg1: i32) -> (i32, i32) {
    %c0_i32 = arith.constant 0 : i32
    %c0_i32_0 = arith.constant 0 : i32
    return %c0_i32, %arg0 : i32, i32
  }
  func.func @transform_3(%arg0: i32, %arg1: i32) -> (i32, i32) {
    %c0_i32 = arith.constant 0 : i32
    return %arg1, %arg0 : i32, i32
  }
}

module attributes {stable_mosaic.version = 11 : i64} {
  func.func @kernel(%arg0: i32, %arg1: memref<1x8x32xf32, #tpu.memory_space<vmem>>, %arg2: memref<32x16xf32, #tpu.memory_space<vmem>>, %arg3: memref<32x16xf32, #tpu.memory_space<vmem>>, %arg4: memref<32x16xf32, #tpu.memory_space<vmem>>, %arg5: memref<16x32xf32, #tpu.memory_space<vmem>>, %arg6: memref<1x32xf32, #tpu.memory_space<vmem>>, %arg7: memref<1x32xf32, #tpu.memory_space<vmem>>, %arg8: memref<1x32xf32, #tpu.memory_space<vmem>>, %arg9: memref<32x128xf32, #tpu.memory_space<vmem>>, %arg10: memref<1x128xf32, #tpu.memory_space<vmem>>, %arg11: memref<128x32xf32, #tpu.memory_space<vmem>>, %arg12: memref<1x32xf32, #tpu.memory_space<vmem>>, %arg13: memref<1x32xf32, #tpu.memory_space<vmem>>, %arg14: memref<1x32xf32, #tpu.memory_space<vmem>>, %arg15: memref<1x8x32xf32, #tpu.memory_space<vmem>>) attributes {dimension_semantics = [#tpu.dimension_semantics<parallel>], iteration_bounds = array<i64: 2>, scalar_prefetch = 0 : i64, scratch_operands = 0 : i64, tpu.core_type = #tpu.core_type<tc>, window_params = [{transform_indices = @transform_0, window_bounds = array<i64: 1, 8, 32>}, {pipeline_mode = #tpu.pipeline_mode<synchronous>, transform_indices = @transform_1, window_bounds = array<i64: 32, 16>}, {pipeline_mode = #tpu.pipeline_mode<synchronous>, transform_indices = @transform_2, window_bounds = array<i64: 32, 16>}, {pipeline_mode = #tpu.pipeline_mode<synchronous>, transform_indices = @transform_3, window_bounds = array<i64: 32, 16>}, {pipeline_mode = #tpu.pipeline_mode<synchronous>, transform_indices = @transform_4, window_bounds = array<i64: 16, 32>}, {pipeline_mode = #tpu.pipeline_mode<synchronous>, transform_indices = @transform_5, window_bounds = array<i64: 1, 32>}, {pipeline_mode = #tpu.pipeline_mode<synchronous>, transform_indices = @transform_6, window_bounds = array<i64: 1, 32>}, {pipeline_mode = #tpu.pipeline_mode<synchronous>, transform_indices = @transform_7, window_bounds = array<i64: 1, 32>}, {pipeline_mode = #tpu.pipeline_mode<synchronous>, transform_indices = @transform_8, window_bounds = array<i64: 32, 128>}, {pipeline_mode = #tpu.pipeline_mode<synchronous>, transform_indices = @transform_9, window_bounds = array<i64: 1, 128>}, {pipeline_mode = #tpu.pipeline_mode<synchronous>, transform_indices = @transform_10, window_bounds = array<i64: 128, 32>}, {pipeline_mode = #tpu.pipeline_mode<synchronous>, transform_indices = @transform_11, window_bounds = array<i64: 1, 32>}, {pipeline_mode = #tpu.pipeline_mode<synchronous>, transform_indices = @transform_12, window_bounds = array<i64: 1, 32>}, {pipeline_mode = #tpu.pipeline_mode<synchronous>, transform_indices = @transform_13, window_bounds = array<i64: 1, 32>}, {transform_indices = @transform_14, window_bounds = array<i64: 1, 8, 32>}]} {
    %cst = arith.constant 3.200000e+01 : f32
    %cst_0 = arith.constant -5.000000e-01 : f32
    %0 = math.powf %cst, %cst_0 : f32
    %c0 = arith.constant 0 : index
    %c0_1 = arith.constant 0 : index
    %c0_2 = arith.constant 0 : index
    %1 = vector.load %arg1[%c0, %c0_1, %c0_2] : memref<1x8x32xf32, #tpu.memory_space<vmem>>, vector<1x8x32xf32>
    %2 = vector.shape_cast %1 : vector<1x8x32xf32> to vector<8x32xf32>
    %c0_3 = arith.constant 0 : index
    %c0_4 = arith.constant 0 : index
    %3 = vector.load %arg2[%c0_3, %c0_4] : memref<32x16xf32, #tpu.memory_space<vmem>>, vector<32x16xf32>
    %cst_5 = arith.constant dense<0.000000e+00> : vector<8x16xf32>
    %4 = tpu.matmul %2, %3, %cst_5 {dimension_numbers = #tpu.dot_dimension_numbers<[1], [0], [0], [1], [0, 0, 1, 1], [], []>} : vector<8x32xf32>, vector<32x16xf32>, vector<8x16xf32> -> vector<8x16xf32>
    %5 = vector.broadcast %0 : f32 to vector<8x16xf32>
    %6 = arith.mulf %4, %5 : vector<8x16xf32>
    %c0_6 = arith.constant 0 : index
    %c0_7 = arith.constant 0 : index
    %7 = vector.load %arg3[%c0_6, %c0_7] : memref<32x16xf32, #tpu.memory_space<vmem>>, vector<32x16xf32>
    %cst_8 = arith.constant dense<0.000000e+00> : vector<8x16xf32>
    %8 = tpu.matmul %2, %7, %cst_8 {dimension_numbers = #tpu.dot_dimension_numbers<[1], [0], [0], [1], [0, 0, 1, 1], [], []>} : vector<8x32xf32>, vector<32x16xf32>, vector<8x16xf32> -> vector<8x16xf32>
    %c0_9 = arith.constant 0 : index
    %c0_10 = arith.constant 0 : index
    %9 = vector.load %arg4[%c0_9, %c0_10] : memref<32x16xf32, #tpu.memory_space<vmem>>, vector<32x16xf32>
    %cst_11 = arith.constant dense<0.000000e+00> : vector<8x16xf32>
    %10 = tpu.matmul %2, %9, %cst_11 {dimension_numbers = #tpu.dot_dimension_numbers<[1], [0], [0], [1], [0, 0, 1, 1], [], []>} : vector<8x32xf32>, vector<32x16xf32>, vector<8x16xf32> -> vector<8x16xf32>
    %11 = vector.shape_cast %6 : vector<8x16xf32> to vector<1x8x16xf32>
    %12 = vector.shape_cast %8 : vector<8x16xf32> to vector<1x8x16xf32>
    %13 = vector.shape_cast %10 : vector<8x16xf32> to vector<1x8x16xf32>
    "tpu.trace_start"() <{level = 10 : i32, message = "bqh,bkh->bqk"}> : () -> ()
    %cst_12 = arith.constant dense<0.000000e+00> : vector<1x8x8xf32>
    %14 = tpu.matmul %11, %12, %cst_12 {dimension_numbers = #tpu.dot_dimension_numbers<[2], [2], [1], [1], [0, 0, 0, 1, 1, 1], [0], [0]>} : vector<1x8x16xf32>, vector<1x8x16xf32>, vector<1x8x8xf32> -> vector<1x8x8xf32>
    "tpu.trace_stop"() : () -> ()
    %15 = tpu.iota {dimensions = array<i32: 0>} : vector<8x8xi32>
    %16 = tpu.iota {dimensions = array<i32: 1>} : vector<8x8xi32>
    %17 = arith.cmpi sge, %15, %16 : vector<8x8xi32>
    %18 = vector.shape_cast %17 : vector<8x8xi1> to vector<1x8x8xi1>
    %cst_13 = arith.constant -1.000000e+30 : f32
    %19 = vector.broadcast %cst_13 : f32 to vector<1x8x8xf32>
    %20 = arith.select %18, %14, %19 : vector<1x8x8xi1>, vector<1x8x8xf32>
    %cst_14 = arith.constant dense<0xFF800000> : vector<1x8xf32>
    %21 = vector.multi_reduction <maximumf>, %20, %cst_14 [2] : vector<1x8x8xf32> to vector<1x8xf32>
    %22 = vector.shape_cast %21 : vector<1x8xf32> to vector<1x8x1xf32>
    %23 = vector.broadcast %22 : vector<1x8x1xf32> to vector<1x8x8xf32>
    %24 = arith.subf %20, %23 : vector<1x8x8xf32>
    %25 = math.exp %24 : vector<1x8x8xf32>
    %cst_15 = arith.constant dense<0.000000e+00> : vector<1x8xf32>
    %26 = vector.multi_reduction <add>, %25, %cst_15 [2] : vector<1x8x8xf32> to vector<1x8xf32>
    %27 = vector.shape_cast %26 : vector<1x8xf32> to vector<1x8x1xf32>
    %28 = tpu.reciprocal %27 : vector<1x8x1xf32> -> vector<1x8x1xf32>
    %29 = vector.broadcast %28 : vector<1x8x1xf32> to vector<1x8x8xf32>
    %30 = arith.mulf %25, %29 : vector<1x8x8xf32>
    "tpu.trace_start"() <{level = 10 : i32, message = "bqk,bkh->bqh"}> : () -> ()
    %cst_16 = arith.constant dense<0.000000e+00> : vector<1x8x16xf32>
    %31 = tpu.matmul %30, %13, %cst_16 {dimension_numbers = #tpu.dot_dimension_numbers<[2], [1], [1], [2], [0, 0, 0, 1, 1, 2], [0], [0]>} : vector<1x8x8xf32>, vector<1x8x16xf32>, vector<1x8x16xf32> -> vector<1x8x16xf32>
    "tpu.trace_stop"() : () -> ()
    %32 = vector.shape_cast %31 : vector<1x8x16xf32> to vector<8x16xf32>
    %c0_17 = arith.constant 0 : index
    %c0_18 = arith.constant 0 : index
    %33 = vector.load %arg5[%c0_17, %c0_18] : memref<16x32xf32, #tpu.memory_space<vmem>>, vector<16x32xf32>
    %cst_19 = arith.constant dense<0.000000e+00> : vector<8x32xf32>
    %34 = tpu.matmul %32, %33, %cst_19 {dimension_numbers = #tpu.dot_dimension_numbers<[1], [0], [0], [1], [0, 0, 1, 1], [], []>} : vector<8x16xf32>, vector<16x32xf32>, vector<8x32xf32> -> vector<8x32xf32>
    %c0_20 = arith.constant 0 : index
    %c0_21 = arith.constant 0 : index
    %35 = vector.load %arg6[%c0_20, %c0_21] : memref<1x32xf32, #tpu.memory_space<vmem>>, vector<1x32xf32>
    %36 = vector.broadcast %35 : vector<1x32xf32> to vector<8x32xf32>
    %37 = arith.addf %34, %36 : vector<8x32xf32>
    %c0_22 = arith.constant 0 : index
    %c0_23 = arith.constant 0 : index
    %38 = vector.load %arg7[%c0_22, %c0_23] : memref<1x32xf32, #tpu.memory_space<vmem>>, vector<1x32xf32>
    %c0_24 = arith.constant 0 : index
    %c0_25 = arith.constant 0 : index
    %39 = vector.load %arg8[%c0_24, %c0_25] : memref<1x32xf32, #tpu.memory_space<vmem>>, vector<1x32xf32>
    %cst_26 = arith.constant dense<0.000000e+00> : vector<8xf32>
    %40 = vector.multi_reduction <add>, %37, %cst_26 [1] : vector<8x32xf32> to vector<8xf32>
    %41 = vector.shape_cast %40 : vector<8xf32> to vector<8x1xf32>
    %cst_27 = arith.constant 3.200000e+01 : f32
    %42 = vector.broadcast %cst_27 : f32 to vector<8x1xf32>
    %43 = arith.divf %41, %42 : vector<8x1xf32>
    %44 = vector.broadcast %43 : vector<8x1xf32> to vector<8x32xf32>
    %45 = arith.subf %37, %44 : vector<8x32xf32>
    %46 = arith.mulf %45, %45 : vector<8x32xf32>
    %cst_28 = arith.constant dense<0.000000e+00> : vector<8xf32>
    %47 = vector.multi_reduction <add>, %46, %cst_28 [1] : vector<8x32xf32> to vector<8xf32>
    %48 = vector.shape_cast %47 : vector<8xf32> to vector<8x1xf32>
    %cst_29 = arith.constant 3.200000e+01 : f32
    %49 = vector.broadcast %cst_29 : f32 to vector<8x1xf32>
    %50 = arith.divf %48, %49 : vector<8x1xf32>
    %51 = vector.broadcast %43 : vector<8x1xf32> to vector<8x32xf32>
    %52 = arith.subf %37, %51 : vector<8x32xf32>
    %cst_30 = arith.constant 9.99999974E-6 : f32
    %53 = vector.broadcast %cst_30 : f32 to vector<8x1xf32>
    %54 = arith.addf %50, %53 : vector<8x1xf32>
    %55 = math.rsqrt %54 : vector<8x1xf32>
    %56 = vector.broadcast %55 : vector<8x1xf32> to vector<8x32xf32>
    %57 = arith.mulf %52, %56 : vector<8x32xf32>
    %58 = vector.broadcast %38 : vector<1x32xf32> to vector<8x32xf32>
    %59 = arith.mulf %57, %58 : vector<8x32xf32>
    %60 = vector.broadcast %39 : vector<1x32xf32> to vector<8x32xf32>
    %61 = arith.addf %59, %60 : vector<8x32xf32>
    %c0_31 = arith.constant 0 : index
    %c0_32 = arith.constant 0 : index
    %62 = vector.load %arg9[%c0_31, %c0_32] : memref<32x128xf32, #tpu.memory_space<vmem>>, vector<32x128xf32>
    %cst_33 = arith.constant dense<0.000000e+00> : vector<8x128xf32>
    %63 = tpu.matmul %61, %62, %cst_33 {dimension_numbers = #tpu.dot_dimension_numbers<[1], [0], [0], [1], [0, 0, 1, 1], [], []>} : vector<8x32xf32>, vector<32x128xf32>, vector<8x128xf32> -> vector<8x128xf32>
    %c0_34 = arith.constant 0 : index
    %c0_35 = arith.constant 0 : index
    %64 = vector.load %arg10[%c0_34, %c0_35] : memref<1x128xf32, #tpu.memory_space<vmem>>, vector<1x128xf32>
    %65 = vector.broadcast %64 : vector<1x128xf32> to vector<8x128xf32>
    %66 = arith.addf %63, %65 : vector<8x128xf32>
    %cst_36 = arith.constant 0.000000e+00 : f32
    %67 = vector.broadcast %cst_36 : f32 to vector<8x128xf32>
    %68 = arith.maximumf %66, %67 : vector<8x128xf32>
    %c0_37 = arith.constant 0 : index
    %c0_38 = arith.constant 0 : index
    %69 = vector.load %arg11[%c0_37, %c0_38] : memref<128x32xf32, #tpu.memory_space<vmem>>, vector<128x32xf32>
    %cst_39 = arith.constant dense<0.000000e+00> : vector<8x32xf32>
    %70 = tpu.matmul %68, %69, %cst_39 {dimension_numbers = #tpu.dot_dimension_numbers<[1], [0], [0], [1], [0, 0, 1, 1], [], []>} : vector<8x128xf32>, vector<128x32xf32>, vector<8x32xf32> -> vector<8x32xf32>
    %c0_40 = arith.constant 0 : index
    %c0_41 = arith.constant 0 : index
    %71 = vector.load %arg12[%c0_40, %c0_41] : memref<1x32xf32, #tpu.memory_space<vmem>>, vector<1x32xf32>
    %72 = vector.broadcast %71 : vector<1x32xf32> to vector<8x32xf32>
    %73 = arith.addf %70, %72 : vector<8x32xf32>
    %c0_42 = arith.constant 0 : index
    %c0_43 = arith.constant 0 : index
    %74 = vector.load %arg13[%c0_42, %c0_43] : memref<1x32xf32, #tpu.memory_space<vmem>>, vector<1x32xf32>
    %c0_44 = arith.constant 0 : index
    %c0_45 = arith.constant 0 : index
    %75 = vector.load %arg14[%c0_44, %c0_45] : memref<1x32xf32, #tpu.memory_space<vmem>>, vector<1x32xf32>
    %cst_46 = arith.constant dense<0.000000e+00> : vector<8xf32>
    %76 = vector.multi_reduction <add>, %73, %cst_46 [1] : vector<8x32xf32> to vector<8xf32>
    %77 = vector.shape_cast %76 : vector<8xf32> to vector<8x1xf32>
    %cst_47 = arith.constant 3.200000e+01 : f32
    %78 = vector.broadcast %cst_47 : f32 to vector<8x1xf32>
    %79 = arith.divf %77, %78 : vector<8x1xf32>
    %80 = vector.broadcast %79 : vector<8x1xf32> to vector<8x32xf32>
    %81 = arith.subf %73, %80 : vector<8x32xf32>
    %82 = arith.mulf %81, %81 : vector<8x32xf32>
    %cst_48 = arith.constant dense<0.000000e+00> : vector<8xf32>
    %83 = vector.multi_reduction <add>, %82, %cst_48 [1] : vector<8x32xf32> to vector<8xf32>
    %84 = vector.shape_cast %83 : vector<8xf32> to vector<8x1xf32>
    %cst_49 = arith.constant 3.200000e+01 : f32
    %85 = vector.broadcast %cst_49 : f32 to vector<8x1xf32>
    %86 = arith.divf %84, %85 : vector<8x1xf32>
    %87 = vector.broadcast %79 : vector<8x1xf32> to vector<8x32xf32>
    %88 = arith.subf %73, %87 : vector<8x32xf32>
    %cst_50 = arith.constant 9.99999974E-6 : f32
    %89 = vector.broadcast %cst_50 : f32 to vector<8x1xf32>
    %90 = arith.addf %86, %89 : vector<8x1xf32>
    %91 = math.rsqrt %90 : vector<8x1xf32>
    %92 = vector.broadcast %91 : vector<8x1xf32> to vector<8x32xf32>
    %93 = arith.mulf %88, %92 : vector<8x32xf32>
    %94 = vector.broadcast %74 : vector<1x32xf32> to vector<8x32xf32>
    %95 = arith.mulf %93, %94 : vector<8x32xf32>
    %96 = vector.broadcast %75 : vector<1x32xf32> to vector<8x32xf32>
    %97 = arith.addf %95, %96 : vector<8x32xf32>
    %98 = vector.shape_cast %97 : vector<8x32xf32> to vector<1x8x32xf32>
    %c0_51 = arith.constant 0 : index
    %c0_52 = arith.constant 0 : index
    %c0_53 = arith.constant 0 : index
    %99 = vector.load %arg15[%c0_51, %c0_52, %c0_53] : memref<1x8x32xf32, #tpu.memory_space<vmem>>, vector<1x8x32xf32>
    tpu.vector_store %arg15[%c0_51, %c0_52, %c0_53], %98 {strides = array<i32>} : memref<1x8x32xf32, #tpu.memory_space<vmem>>, vector<1x8x32xf32>,
    return
  }
  func.func @transform_0(%arg0: i32) -> (i32, i32, i32) {
    %c0_i32 = arith.constant 0 : i32
    %c0_i32_0 = arith.constant 0 : i32
    %c0_i32_1 = arith.constant 0 : i32
    return %arg0, %c0_i32, %c0_i32_0 : i32, i32, i32
  }
  func.func @transform_1(%arg0: i32) -> (i32, i32) {
    %c0_i32 = arith.constant 0 : i32
    %c0_i32_0 = arith.constant 0 : i32
    %c0_i32_1 = arith.constant 0 : i32
    return %c0_i32, %c0_i32_0 : i32, i32
  }
  func.func @transform_2(%arg0: i32) -> (i32, i32) {
    %c0_i32 = arith.constant 0 : i32
    %c0_i32_0 = arith.constant 0 : i32
    %c0_i32_1 = arith.constant 0 : i32
    return %c0_i32, %c0_i32_0 : i32, i32
  }
  func.func @transform_3(%arg0: i32) -> (i32, i32) {
    %c0_i32 = arith.constant 0 : i32
    %c0_i32_0 = arith.constant 0 : i32
    %c0_i32_1 = arith.constant 0 : i32
    return %c0_i32, %c0_i32_0 : i32, i32
  }
  func.func @transform_4(%arg0: i32) -> (i32, i32) {
    %c0_i32 = arith.constant 0 : i32
    %c0_i32_0 = arith.constant 0 : i32
    %c0_i32_1 = arith.constant 0 : i32
    return %c0_i32, %c0_i32_0 : i32, i32
  }
  func.func @transform_5(%arg0: i32) -> (i32, i32) {
    %c0_i32 = arith.constant 0 : i32
    %c0_i32_0 = arith.constant 0 : i32
    %c0_i32_1 = arith.constant 0 : i32
    return %c0_i32, %c0_i32_0 : i32, i32
  }
  func.func @transform_6(%arg0: i32) -> (i32, i32) {
    %c0_i32 = arith.constant 0 : i32
    %c0_i32_0 = arith.constant 0 : i32
    %c0_i32_1 = arith.constant 0 : i32
    return %c0_i32, %c0_i32_0 : i32, i32
  }
  func.func @transform_7(%arg0: i32) -> (i32, i32) {
    %c0_i32 = arith.constant 0 : i32
    %c0_i32_0 = arith.constant 0 : i32
    %c0_i32_1 = arith.constant 0 : i32
    return %c0_i32, %c0_i32_0 : i32, i32
  }
  func.func @transform_8(%arg0: i32) -> (i32, i32) {
    %c0_i32 = arith.constant 0 : i32
    %c0_i32_0 = arith.constant 0 : i32
    %c0_i32_1 = arith.constant 0 : i32
    return %c0_i32, %c0_i32_0 : i32, i32
  }
  func.func @transform_9(%arg0: i32) -> (i32, i32) {
    %c0_i32 = arith.constant 0 : i32
    %c0_i32_0 = arith.constant 0 : i32
    %c0_i32_1 = arith.constant 0 : i32
    return %c0_i32, %c0_i32_0 : i32, i32
  }
  func.func @transform_10(%arg0: i32) -> (i32, i32) {
    %c0_i32 = arith.constant 0 : i32
    %c0_i32_0 = arith.constant 0 : i32
    %c0_i32_1 = arith.constant 0 : i32
    return %c0_i32, %c0_i32_0 : i32, i32
  }
  func.func @transform_11(%arg0: i32) -> (i32, i32) {
    %c0_i32 = arith.constant 0 : i32
    %c0_i32_0 = arith.constant 0 : i32
    %c0_i32_1 = arith.constant 0 : i32
    return %c0_i32, %c0_i32_0 : i32, i32
  }
  func.func @transform_12(%arg0: i32) -> (i32, i32) {
    %c0_i32 = arith.constant 0 : i32
    %c0_i32_0 = arith.constant 0 : i32
    %c0_i32_1 = arith.constant 0 : i32
    return %c0_i32, %c0_i32_0 : i32, i32
  }
  func.func @transform_13(%arg0: i32) -> (i32, i32) {
    %c0_i32 = arith.constant 0 : i32
    %c0_i32_0 = arith.constant 0 : i32
    %c0_i32_1 = arith.constant 0 : i32
    return %c0_i32, %c0_i32_0 : i32, i32
  }
  func.func @transform_14(%arg0: i32) -> (i32, i32, i32) {
    %c0_i32 = arith.constant 0 : i32
    %c0_i32_0 = arith.constant 0 : i32
    %c0_i32_1 = arith.constant 0 : i32
    return %arg0, %c0_i32, %c0_i32_0 : i32, i32, i32
  }
}

</mosaic_0001>

<llo_original>
// kernel: gpt_forward.3
$region0: #{gpt_forward.3}
  #allocation0 [shape = 'u32[]', space=smem, size = 0x4, offset = 0x4, fixed_abs, tag = 'smem constant byte address 0x4 - core index']
  #allocation1 [shape = 'u32[144,128]{1,0:T(1,128)}', space=vmem, size = 0x12000, scoped, tag = 'internal scratch']
  %s0 = inlined_call_operand.hbm [shape: f32[16,32], index: 0, kind: input, shape index: {}]
  %s1 = inlined_call_operand.hbm [shape: f32[32,64], index: 1, kind: input, shape index: {}]
  %s2 = inlined_call_operand.hbm [shape: f32[1,64], index: 2, kind: input, shape index: {}]
  %s3 = inlined_call_operand.hbm [shape: f32[16,64], index: 3, kind: output, shape index: {}]
  %s4 = sld [smem:[#allocation0]]
  $region34: #{gpt_forward.3} parent=0
    _
  %s6 = ssub.s32 1, %s4
  %s7 = scalar_select 0, %s6, %s4
  $region1: #{gpt_forward.3} parent=0
    #allocation2 [shape = 'u8[8192]{0}', space=vmem, size = 0x2000, scoped, tag = 'input window, operand 0, single buffered']
    #allocation3 [shape = 's32[1]{0}', space=sflag, size = 0x4, scoped, tag = 'scoped memory for gpt_forward.3']
    #allocation4 [shape = 's32[1]{0}', space=sflag, size = 0x4, scoped, tag = 'scoped memory for gpt_forward.3']
    #allocation5 [shape = 'u8[16384]{0}', space=vmem, size = 0x4000, scoped, tag = 'input window, operand 1, single buffered']
    #allocation6 [shape = 's32[1]{0}', space=sflag, size = 0x4, scoped, tag = 'scoped memory for gpt_forward.3']
    #allocation7 [shape = 'u8[512]{0}', space=vmem, size = 0x400, scoped, tag = 'input window, operand 2, single buffered']
    #allocation8 [shape = 'u8[8192]{0}', space=vmem, size = 0x2000, scoped, tag = 'output window, operand 0, single buffered']
    %8 = vsyncpa [#allocation3], 0
    %9 = vsyncpa [#allocation6], 0
    %10 = vsyncpa [#allocation4], 0
    // Predicated region
    $region2: #{gpt_forward.3} parent=1 // pred_check
      _
    $region3: #{gpt_forward.3} parent=1 // pred_check_branch
      %12 = sbr.rel (0) target = $region5
    $region4: #{gpt_forward.3} parent=1 // pred_region
      %s14 = ssub.s32 256, 256
      %15 = vsyncadd [#allocation3], %s14
      %s16 = sshll.u32 [#allocation2], 4
      %s17 = int_to_ptr.vmem [resolvable:$true] %s16
      %22 = dma.hbm_to_vmem [thread:$0]  %s0, 256, %s17, [#allocation3], 128, 128, 8
    $region5: #{gpt_forward.3} parent=1 // pred_fallthru
      _
    // Predicated region
    $region6: #{gpt_forward.3} parent=1 // pred_check
      _
    $region7: #{gpt_forward.3} parent=1 // pred_check_branch
      %24 = sbr.rel (0) target = $region9
    $region8: #{gpt_forward.3} parent=1 // pred_region
      %s26 = ssub.s32 512, 512
      %27 = vsyncadd [#allocation6], %s26
      %s28 = sshll.u32 [#allocation5], 4
      %s29 = int_to_ptr.vmem [resolvable:$true] %s28
      %34 = dma.hbm_to_vmem [thread:$0]  %s1, 512, %s29, [#allocation6], 128, 128, 8
    $region9: #{gpt_forward.3} parent=1 // pred_fallthru
      _
    // Predicated region
    $region10: #{gpt_forward.3} parent=1 // pred_check
      _
    $region11: #{gpt_forward.3} parent=1 // pred_check_branch
      %36 = sbr.rel (0) target = $region13
    $region12: #{gpt_forward.3} parent=1 // pred_region
      %s38 = ssub.s32 16, 16
      %39 = vsyncadd [#allocation6], %s38
      %s41 = sshll.u32 [#allocation7], 4
      %s42 = int_to_ptr.vmem [resolvable:$true] %s41
      %44 = dma.hbm_to_vmem [thread:$0]  %s2, 16, %s42, [#allocation6]
    $region13: #{gpt_forward.3} parent=1 // pred_fallthru
      _
    // Predicated region
    $region14: #{gpt_forward.3} parent=1 // pred_check
      _
    $region15: #{gpt_forward.3} parent=1 // pred_check_branch
      %46 = sbr.rel (0) target = $region17
    $region16: #{gpt_forward.3} parent=1 // pred_region
      %47 = dma.done [#allocation3], 256
    $region17: #{gpt_forward.3} parent=1 // pred_fallthru
      _
    // Predicated region
    $region18: #{gpt_forward.3} parent=1 // pred_check
      _
    $region19: #{gpt_forward.3} parent=1 // pred_check_branch
      %49 = sbr.rel (0) target = $region21
    $region20: #{gpt_forward.3} parent=1 // pred_region
      %50 = dma.done [#allocation6], 512
    $region21: #{gpt_forward.3} parent=1 // pred_fallthru
      _
    // Predicated region
    $region22: #{gpt_forward.3} parent=1 // pred_check
      _
    $region23: #{gpt_forward.3} parent=1 // pred_check_branch
      %52 = sbr.rel (0) target = $region25
    $region24: #{gpt_forward.3} parent=1 // pred_region
      %53 = dma.done [#allocation6], 16
    $region25: #{gpt_forward.3} parent=1 // pred_fallthru
      _
    %v54 = vld [vmem:[#allocation2] sm:$0xff]
    %v55 = vld [vmem:[#allocation2 + $0x8] sm:$0xff]
    %v56 = vld [vmem:[#allocation5] sm:$0xff]
    %v57 = vld [vmem:[#allocation5 + $0x8] sm:$0xff]
    %v58 = vld [vmem:[#allocation5 + $0x10] sm:$0xff]
    %v59 = vld [vmem:[#allocation5 + $0x18] sm:$0xff]
    %v60 = vld [vmem:[#allocation7] sm:$0x1]
    %v62 = vlaneseq
    %v63 = vshrl.u32 %v62, 7
    %v64 = vsub.s32 0, %v63
    %v65 = vrot.slane %v60, %v64
    %vm67 = vcmask 261120
    %v69 = vsel %vm67, %v54, 0
    %v72 = vsel %vm67, %v55, 0
    %74 = vmatprep.subr.mxu0 0.0
    %75 = vmatpush1.msra.mxu0 %v56
    %76 = vmatprep.subr.mxu0 0.0
    %77 = vmatpush1.msra.mxu0 %v57
    %78 = vmatprep.subr.mxu0 0.0
    %79 = vmatpush1.msra.mxu0 %v58
    %80 = vmatprep.subr.mxu0 0.0
    %81 = vmatpush1.msra.mxu0 %v59
    %82 = vmatprep.subr.mxu0 0.0
    %83 = vmatpush1.msra.mxu0 0.0
    %84 = vmatprep.subr.mxu0 0.0
    %85 = vmatpush1.msra.mxu0 0.0
    %86 = vmatprep.subr.mxu0 0.0
    %87 = vmatpush1.msra.mxu0 0.0
    %88 = vmatprep.subr.mxu0 0.0
    %89 = vmatpush1.msra.mxu0 0.0
    %90 = vmatprep.subr.mxu0 0.0
    %91 = vmatpush1.msra.mxu0 0.0
    %92 = vmatprep.subr.mxu0 0.0
    %93 = vmatpush1.msra.mxu0 0.0
    %94 = vmatprep.subr.mxu0 0.0
    %95 = vmatpush1.msra.mxu0 0.0
    %96 = vmatprep.subr.mxu0 0.0
    %97 = vmatpush1.msra.mxu0 0.0
    %98 = vmatprep.subr.mxu0 0.0
    %99 = vmatpush1.msra.mxu0 0.0
    %100 = vmatprep.subr.mxu0 0.0
    %101 = vmatpush1.msra.mxu0 0.0
    %102 = vmatprep.subr.mxu0 0.0
    %103 = vmatpush1.msra.mxu0 0.0
    %104 = vmatprep.subr.mxu0 0.0
    %105 = vmatpush1.msra.mxu0 0.0
    %106 = vmatprep.subr.mxu0 0.0
    %107 = vmatpush1.msra.mxu0 0.0
    %108 = vmatprep.subr.mxu0 0.0
    %109 = vmatpush1.msra.mxu0 0.0
    %110 = vmatprep.subr.mxu0 0.0
    %111 = vmatpush1.msra.mxu0 0.0
    %112 = vmatprep.subr.mxu0 0.0
    %113 = vmatpush1.msra.mxu0 0.0
    %114 = vmatprep.subr.mxu0 0.0
    %115 = vmatpush1.msra.mxu0 0.0
    %116 = vmatprep.subr.mxu0 0.0
    %117 = vmatpush1.msra.mxu0 0.0
    %118 = vmatprep.subr.mxu0 0.0
    %119 = vmatpush1.msra.mxu0 0.0
    %120 = vmatprep.subr.mxu0 0.0
    %121 = vmatpush1.msra.mxu0 0.0
    %122 = vmatprep.subr.mxu0 0.0
    %123 = vmatpush1.msra.mxu0 0.0
    %124 = vmatprep.subr.mxu0 0.0
    %125 = vmatpush1.msra.mxu0 0.0
    %126 = vmatprep.subr.mxu0 0.0
    %127 = vmatpush1.msra.mxu0 0.0
    %128 = vmatprep.subr.mxu0 0.0
    %129 = vmatpush1.msra.mxu0 0.0
    %130 = vmatprep.subr.mxu0 0.0
    %131 = vmatpush1.msra.mxu0 0.0
    %132 = vmatprep.subr.mxu0 0.0
    %133 = vmatpush1.msra.mxu0 0.0
    %134 = vmatprep.subr.mxu0 0.0
    %135 = vmatpush1.msra.mxu0 0.0
    %136 = vmatprep.subr.mxu0 0.0
    %137 = vmatpush1.msra.mxu0 0.0
    %138 = vmatprep.mubr.f32.mxu0 0.0
    %139 = vmatmul.mubr.f32.gmra.mrb[0].mxu0 %v69
    %v140 = vpop.f32.mrb[0].mxu0
    %v141 = vadd.f32 %v65, %v140
    %v142 = vpop.f32.mrb[0].mxu0
    %143 = vmatprep.mubr.f32.mxu0 0.0
    %144 = vmatmul.mubr.f32.gmra.mrb[0].mxu0 %v72
    %v145 = vpop.f32.mrb[0].mxu0
    %v146 = vadd.f32 %v65, %v145
    %v147 = vpop.f32.mrb[0].mxu0
    %148 = vdwg.mxu0
    %vm149 = vcmask 523264
    %150 = vst.msk [vmem:[#allocation8] sm:$0xff] %vm149, %v141
    %151 = vst.msk [vmem:[#allocation8 + $0x8] sm:$0xff] %vm149, %v146
    // Predicated region
    $region26: #{gpt_forward.3} parent=1 // pred_check
      _
    $region27: #{gpt_forward.3} parent=1 // pred_check_branch
      %153 = sbr.rel (0) target = $region29
    $region28: #{gpt_forward.3} parent=1 // pred_region
      %s155 = ssub.s32 256, 256
      %156 = vsyncadd [#allocation4], %s155
      %s157 = sshll.u32 [#allocation8], 4
      %s158 = int_to_ptr.vmem [resolvable:$true] %s157
      %163 = dma.vmem_to_hbm [thread:$0]  %s158, 256, %s3, [#allocation4], 128, 128, 8
    $region29: #{gpt_forward.3} parent=1 // pred_fallthru
      _
    // Predicated region
    $region30: #{gpt_forward.3} parent=1 // pred_check
      _
    $region31: #{gpt_forward.3} parent=1 // pred_check_branch
      %165 = sbr.rel (0) target = $region33
    $region32: #{gpt_forward.3} parent=1 // pred_region
      %166 = dma.done [#allocation4], 256
    $region33: #{gpt_forward.3} parent=1 // pred_fallthru
      _
    %167 = vsyncpa [#allocation3], 1
    %168 = vsyncpa [#allocation6], 1
    %169 = vsyncpa [#allocation4], 1

// kernel: gpt_forward.2
$region0: #{gpt_forward.2}
  #allocation0 [shape = 'u32[]', space=smem, size = 0x4, offset = 0x4, fixed_abs, tag = 'smem constant byte address 0x4 - core index']
  #allocation1 [shape = 'u32[144,128]{1,0:T(1,128)}', space=vmem, size = 0x12000, scoped, tag = 'internal scratch']
  %s0 = inlined_call_operand.hbm [shape: f32[2,8,32], index: 0, kind: input, shape index: {}]
  %s1 = inlined_call_operand.hbm [shape: f32[32,16], index: 1, kind: input, shape index: {}]
  %s2 = inlined_call_operand.hbm [shape: f32[32,16], index: 2, kind: input, shape index: {}]
  %s3 = inlined_call_operand.hbm [shape: f32[32,16], index: 3, kind: input, shape index: {}]
  %s4 = inlined_call_operand.hbm [shape: f32[16,32], index: 4, kind: input, shape index: {}]
  %s5 = inlined_call_operand.hbm [shape: f32[1,32], index: 5, kind: input, shape index: {}]
  %s6 = inlined_call_operand.hbm [shape: f32[1,32], index: 6, kind: input, shape index: {}]
  %s7 = inlined_call_operand.hbm [shape: f32[1,32], index: 7, kind: input, shape index: {}]
  %s8 = inlined_call_operand.hbm [shape: f32[32,128], index: 8, kind: input, shape index: {}]
  %s9 = inlined_call_operand.hbm [shape: f32[1,128], index: 9, kind: input, shape index: {}]
  %s10 = inlined_call_operand.hbm [shape: f32[128,32], index: 10, kind: input, shape index: {}]
  %s11 = inlined_call_operand.hbm [shape: f32[1,32], index: 11, kind: input, shape index: {}]
  %s12 = inlined_call_operand.hbm [shape: f32[1,32], index: 12, kind: input, shape index: {}]
  %s13 = inlined_call_operand.hbm [shape: f32[1,32], index: 13, kind: input, shape index: {}]
  %s14 = inlined_call_operand.hbm [shape: f32[2,8,32], index: 14, kind: output, shape index: {}]
  %s15 = sld [smem:[#allocation0]]
  $region145: #{gpt_forward.2} parent=0
    _
  %s17 = ssub.s32 1, %s15
  %s18 = scalar_select 0, %s17, %s15
  $region1: #{gpt_forward.2} parent=0
    #allocation2 [shape = 'u8[8192]{0}', space=vmem, size = 0x2000, scoped, tag = 'input window, operand 0']
    #allocation3 [shape = 's32[2]{0}', space=sflag, size = 0x8, scoped, tag = 'scoped memory for gpt_forward.2']
    #allocation4 [shape = 's32[2]{0}', space=sflag, size = 0x8, scoped, tag = 'scoped memory for gpt_forward.2']
    #allocation5 [shape = 'u8[16384]{0}', space=vmem, size = 0x4000, scoped, tag = 'input window, operand 1, single buffered']
    #allocation6 [shape = 's32[1]{0}', space=sflag, size = 0x4, scoped, tag = 'scoped memory for gpt_forward.2']
    #allocation7 [shape = 'u8[16384]{0}', space=vmem, size = 0x4000, scoped, tag = 'input window, operand 2, single buffered']
    #allocation8 [shape = 'u8[16384]{0}', space=vmem, size = 0x4000, scoped, tag = 'input window, operand 3, single buffered']
    #allocation9 [shape = 's32[1]{0}', space=sflag, size = 0x4, scoped, tag = 'scoped memory for gpt_forward.2']
    #allocation10 [shape = 'u8[8192]{0}', space=vmem, size = 0x2000, scoped, tag = 'input window, operand 4, single buffered']
    #allocation11 [shape = 'u8[512]{0}', space=vmem, size = 0x400, scoped, tag = 'input window, operand 5, single buffered']
    #allocation12 [shape = 's32[1]{0}', space=sflag, size = 0x4, scoped, tag = 'scoped memory for gpt_forward.2']
    #allocation13 [shape = 'u8[512]{0}', space=vmem, size = 0x400, scoped, tag = 'input window, operand 6, single buffered']
    #allocation14 [shape = 'u8[512]{0}', space=vmem, size = 0x400, scoped, tag = 'input window, operand 7, single buffered']
    #allocation15 [shape = 's32[1]{0}', space=sflag, size = 0x4, scoped, tag = 'scoped memory for gpt_forward.2']
    #allocation16 [shape = 'u8[16384]{0}', space=vmem, size = 0x4000, scoped, tag = 'input window, operand 8, single buffered']
    #allocation17 [shape = 'u8[512]{0}', space=vmem, size = 0x400, scoped, tag = 'input window, operand 9, single buffered']
    #allocation18 [shape = 's32[1]{0}', space=sflag, size = 0x4, scoped, tag = 'scoped memory for gpt_forward.2']
    #allocation19 [shape = 'u8[65536]{0}', space=vmem, size = 0x10000, scoped, tag = 'input window, operand 10, single buffered']
    #allocation20 [shape = 'u8[512]{0}', space=vmem, size = 0x400, scoped, tag = 'input window, operand 11, single buffered']
    #allocation21 [shape = 's32[1]{0}', space=sflag, size = 0x4, scoped, tag = 'scoped memory for gpt_forward.2']
    #allocation22 [shape = 'u8[512]{0}', space=vmem, size = 0x400, scoped, tag = 'input window, operand 12, single buffered']
    #allocation23 [shape = 'u8[512]{0}', space=vmem, size = 0x400, scoped, tag = 'input window, operand 13, single buffered']
    #allocation24 [shape = 's32[1]{0}', space=sflag, size = 0x4, scoped, tag = 'scoped memory for gpt_forward.2']
    #allocation25 [shape = 'u8[8192]{0}', space=vmem, size = 0x2000, scoped, tag = 'output window, operand 0']
    %19 = vsyncpa [#allocation3], 0
    %s20 = scalar_lea.sflag [#allocation3], 1
    %21 = vsyncpa %s20, 0
    %22 = vsyncpa [#allocation6], 0
    %23 = vsyncpa [#allocation9], 0
    %24 = vsyncpa [#allocation12], 0
    %25 = vsyncpa [#allocation15], 0
    %26 = vsyncpa [#allocation18], 0
    %27 = vsyncpa [#allocation21], 0
    %28 = vsyncpa [#allocation24], 0
    %29 = vsyncpa [#allocation4], 0
    %s30 = scalar_lea.sflag [#allocation4], 1
    %31 = vsyncpa %s30, 0
    loop: start=0, step=1, limit=4
    $region2: #{gpt_forward.2} parent=1 // loop_pre_header
      _
    $region3: #{gpt_forward.2} parent=1 // loop_header
      %s33 = sphi 0, %s37
      %p34 = scmp.ge.s32.totalorder %s33, 4
      %s43 = sphi 0, %s45
      %s46 = sphi 0, %s43
      %s47 = sphi 0, %s46
      %s63 = sphi 0, %s47
      %s67 = sphi 0, %s67
      %s69 = sphi 0, %s67
      %s70 = sphi 0, %s69
      %s84 = sphi 0, %s70
      %s88 = sphi 0, %s88
      %s90 = sphi 0, %s88
      %s91 = sphi 0, %s90
      %s105 = sphi 0, %s91
      %s109 = sphi 0, %s109
      %s111 = sphi 0, %s109
      %s112 = sphi 0, %s111
      %s126 = sphi 0, %s112
      %s130 = sphi 0, %s130
      %s132 = sphi 0, %s130
      %s133 = sphi 0, %s132
      %s147 = sphi 0, %s133
      %s151 = sphi 0, %s151
      %s153 = sphi 0, %s151
      %s154 = sphi 0, %s153
      %s168 = sphi 0, %s154
      %s172 = sphi 0, %s172
      %s174 = sphi 0, %s172
      %s175 = sphi 0, %s174
      %s189 = sphi 0, %s175
      %s193 = sphi 0, %s193
      %s195 = sphi 0, %s193
      %s196 = sphi 0, %s195
      %s210 = sphi 0, %s196
      %s214 = sphi 0, %s214
      %s216 = sphi 0, %s214
      %s217 = sphi 0, %s216
      %s231 = sphi 0, %s217
      %s235 = sphi 0, %s235
      %s237 = sphi 0, %s235
      %s238 = sphi 0, %s237
      %s252 = sphi 0, %s238
      %s256 = sphi 0, %s256
      %s258 = sphi 0, %s256
      %s259 = sphi 0, %s258
      %s273 = sphi 0, %s259
      %s277 = sphi 0, %s277
      %s279 = sphi 0, %s277
      %s280 = sphi 0, %s279
      %s294 = sphi 0, %s280
      %s298 = sphi 0, %s298
      %s300 = sphi 0, %s298
      %s301 = sphi 0, %s300
      %s315 = sphi 0, %s301
      %s319 = sphi 0, %s319
      %s321 = sphi 0, %s319
      %s322 = sphi 0, %s321
      %s336 = sphi 0, %s322
      %s342 = sphi 0, %s344
      %s345 = sphi 0, %s342
      %s346 = sphi 0, %s345
      %s362 = sphi 0, %s346
    $region4: #{gpt_forward.2} parent=1 // loop_header_branch
      %36 = sbr.rel (%p34) target = $region8
    $region5: #{gpt_forward.2} parent=1 // loop_body
      %s38 = ssub.s32 %s33, 1
      %s39 = ssub.s32 %s33, 2
      %s40 = sadd.s32 %s33, 1
      %s41 = ssub.s32 %s33, %s40
      %p42 = scmp.eq.s32.totalorder %s41, 0
      %s44 = sadd.s32 %s43, 1
      %s45 = scalar_select %p42, %s43, %s44
      %p48 = pneg %p42
      %p49 = scmp.eq.s32.totalorder %s33, 1
      %p50 = por %p48, %p49
      %p51 = scmp.ne.s32.totalorder %s43, %s46
      %p52 = scmp.eq.s32.totalorder %s33, 0
      %p53 = por %p51, %p52
      %p54 = scmp.ne.s32.totalorder %s43, %s46
      %p55 = scmp.eq.s32.totalorder %s38, 1
      %p56 = por %p54, %p55
      %p57 = scmp.ne.s32.totalorder %s46, %s47
      %p58 = scmp.eq.s32.totalorder %s38, 0
      %p59 = por %p57, %p58
      %p60 = scmp.ne.s32.totalorder %s46, %s47
      %p61 = scmp.eq.s32.totalorder %s39, 1
      %p62 = por %p60, %p61
      %p64 = scmp.ne.s32.totalorder %s47, %s63
      %p65 = scmp.eq.s32.totalorder %s39, 0
      %p66 = por %p64, %p65
      %s68 = sadd.s32 %s67, 1
      %p71 = scmp.eq.s32.totalorder %s33, 1
      %p72 = scmp.ne.s32.totalorder %s67, %s69
      %p73 = scmp.eq.s32.totalorder %s33, 0
      %p74 = por %p72, %p73
      %p75 = scmp.ne.s32.totalorder %s67, %s69
      %p76 = scmp.eq.s32.totalorder %s38, 1
      %p77 = por %p75, %p76
      %p78 = scmp.ne.s32.totalorder %s69, %s70
      %p79 = scmp.eq.s32.totalorder %s38, 0
      %p80 = por %p78, %p79
      %p81 = scmp.ne.s32.totalorder %s69, %s70
      %p82 = scmp.eq.s32.totalorder %s39, 1
      %p83 = por %p81, %p82
      %p85 = scmp.ne.s32.totalorder %s70, %s84
      %p86 = scmp.eq.s32.totalorder %s39, 0
      %p87 = por %p85, %p86
      %s89 = sadd.s32 %s88, 1
      %p92 = scmp.eq.s32.totalorder %s33, 1
      %p93 = scmp.ne.s32.totalorder %s88, %s90
      %p94 = scmp.eq.s32.totalorder %s33, 0
      %p95 = por %p93, %p94
      %p96 = scmp.ne.s32.totalorder %s88, %s90
      %p97 = scmp.eq.s32.totalorder %s38, 1
      %p98 = por %p96, %p97
      %p99 = scmp.ne.s32.totalorder %s90, %s91
      %p100 = scmp.eq.s32.totalorder %s38, 0
      %p101 = por %p99, %p100
      %p102 = scmp.ne.s32.totalorder %s90, %s91
      %p103 = scmp.eq.s32.totalorder %s39, 1
      %p104 = por %p102, %p103
      %p106 = scmp.ne.s32.totalorder %s91, %s105
      %p107 = scmp.eq.s32.totalorder %s39, 0
      %p108 = por %p106, %p107
      %s110 = sadd.s32 %s109, 1
      %p113 = scmp.eq.s32.totalorder %s33, 1
      %p114 = scmp.ne.s32.totalorder %s109, %s111
      %p115 = scmp.eq.s32.totalorder %s33, 0
      %p116 = por %p114, %p115
      %p117 = scmp.ne.s32.totalorder %s109, %s111
      %p118 = scmp.eq.s32.totalorder %s38, 1
      %p119 = por %p117, %p118
      %p120 = scmp.ne.s32.totalorder %s111, %s112
      %p121 = scmp.eq.s32.totalorder %s38, 0
      %p122 = por %p120, %p121
      %p123 = scmp.ne.s32.totalorder %s111, %s112
      %p124 = scmp.eq.s32.totalorder %s39, 1
      %p125 = por %p123, %p124
      %p127 = scmp.ne.s32.totalorder %s112, %s126
      %p128 = scmp.eq.s32.totalorder %s39, 0
      %p129 = por %p127, %p128
      %s131 = sadd.s32 %s130, 1
      %p134 = scmp.eq.s32.totalorder %s33, 1
      %p135 = scmp.ne.s32.totalorder %s130, %s132
      %p136 = scmp.eq.s32.totalorder %s33, 0
      %p137 = por %p135, %p136
      %p138 = scmp.ne.s32.totalorder %s130, %s132
      %p139 = scmp.eq.s32.totalorder %s38, 1
      %p140 = por %p138, %p139
      %p141 = scmp.ne.s32.totalorder %s132, %s133
      %p142 = scmp.eq.s32.totalorder %s38, 0
      %p143 = por %p141, %p142
      %p144 = scmp.ne.s32.totalorder %s132, %s133
      %p145 = scmp.eq.s32.totalorder %s39, 1
      %p146 = por %p144, %p145
      %p148 = scmp.ne.s32.totalorder %s133, %s147
      %p149 = scmp.eq.s32.totalorder %s39, 0
      %p150 = por %p148, %p149
      %s152 = sadd.s32 %s151, 1
      %p155 = scmp.eq.s32.totalorder %s33, 1
      %p156 = scmp.ne.s32.totalorder %s151, %s153
      %p157 = scmp.eq.s32.totalorder %s33, 0
      %p158 = por %p156, %p157
      %p159 = scmp.ne.s32.totalorder %s151, %s153
      %p160 = scmp.eq.s32.totalorder %s38, 1
      %p161 = por %p159, %p160
      %p162 = scmp.ne.s32.totalorder %s153, %s154
      %p163 = scmp.eq.s32.totalorder %s38, 0
      %p164 = por %p162, %p163
      %p165 = scmp.ne.s32.totalorder %s153, %s154
      %p166 = scmp.eq.s32.totalorder %s39, 1
      %p167 = por %p165, %p166
      %p169 = scmp.ne.s32.totalorder %s154, %s168
      %p170 = scmp.eq.s32.totalorder %s39, 0
      %p171 = por %p169, %p170
      %s173 = sadd.s32 %s172, 1
      %p176 = scmp.eq.s32.totalorder %s33, 1
      %p177 = scmp.ne.s32.totalorder %s172, %s174
      %p178 = scmp.eq.s32.totalorder %s33, 0
      %p179 = por %p177, %p178
      %p180 = scmp.ne.s32.totalorder %s172, %s174
      %p181 = scmp.eq.s32.totalorder %s38, 1
      %p182 = por %p180, %p181
      %p183 = scmp.ne.s32.totalorder %s174, %s175
      %p184 = scmp.eq.s32.totalorder %s38, 0
      %p185 = por %p183, %p184
      %p186 = scmp.ne.s32.totalorder %s174, %s175
      %p187 = scmp.eq.s32.totalorder %s39, 1
      %p188 = por %p186, %p187
      %p190 = scmp.ne.s32.totalorder %s175, %s189
      %p191 = scmp.eq.s32.totalorder %s39, 0
      %p192 = por %p190, %p191
      %s194 = sadd.s32 %s193, 1
      %p197 = scmp.eq.s32.totalorder %s33, 1
      %p198 = scmp.ne.s32.totalorder %s193, %s195
      %p199 = scmp.eq.s32.totalorder %s33, 0
      %p200 = por %p198, %p199
      %p201 = scmp.ne.s32.totalorder %s193, %s195
      %p202 = scmp.eq.s32.totalorder %s38, 1
      %p203 = por %p201, %p202
      %p204 = scmp.ne.s32.totalorder %s195, %s196
      %p205 = scmp.eq.s32.totalorder %s38, 0
      %p206 = por %p204, %p205
      %p207 = scmp.ne.s32.totalorder %s195, %s196
      %p208 = scmp.eq.s32.totalorder %s39, 1
      %p209 = por %p207, %p208
      %p211 = scmp.ne.s32.totalorder %s196, %s210
      %p212 = scmp.eq.s32.totalorder %s39, 0
      %p213 = por %p211, %p212
      %s215 = sadd.s32 %s214, 1
      %p218 = scmp.eq.s32.totalorder %s33, 1
      %p219 = scmp.ne.s32.totalorder %s214, %s216
      %p220 = scmp.eq.s32.totalorder %s33, 0
      %p221 = por %p219, %p220
      %p222 = scmp.ne.s32.totalorder %s214, %s216
      %p223 = scmp.eq.s32.totalorder %s38, 1
      %p224 = por %p222, %p223
      %p225 = scmp.ne.s32.totalorder %s216, %s217
      %p226 = scmp.eq.s32.totalorder %s38, 0
      %p227 = por %p225, %p226
      %p228 = scmp.ne.s32.totalorder %s216, %s217
      %p229 = scmp.eq.s32.totalorder %s39, 1
      %p230 = por %p228, %p229
      %p232 = scmp.ne.s32.totalorder %s217, %s231
      %p233 = scmp.eq.s32.totalorder %s39, 0
      %p234 = por %p232, %p233
      %s236 = sadd.s32 %s235, 1
      %p239 = scmp.eq.s32.totalorder %s33, 1
      %p240 = scmp.ne.s32.totalorder %s235, %s237
      %p241 = scmp.eq.s32.totalorder %s33, 0
      %p242 = por %p240, %p241
      %p243 = scmp.ne.s32.totalorder %s235, %s237
      %p244 = scmp.eq.s32.totalorder %s38, 1
      %p245 = por %p243, %p244
      %p246 = scmp.ne.s32.totalorder %s237, %s238
      %p247 = scmp.eq.s32.totalorder %s38, 0
      %p248 = por %p246, %p247
      %p249 = scmp.ne.s32.totalorder %s237, %s238
      %p250 = scmp.eq.s32.totalorder %s39, 1
      %p251 = por %p249, %p250
      %p253 = scmp.ne.s32.totalorder %s238, %s252
      %p254 = scmp.eq.s32.totalorder %s39, 0
      %p255 = por %p253, %p254
      %s257 = sadd.s32 %s256, 1
      %p260 = scmp.eq.s32.totalorder %s33, 1
      %p261 = scmp.ne.s32.totalorder %s256, %s258
      %p262 = scmp.eq.s32.totalorder %s33, 0
      %p263 = por %p261, %p262
      %p264 = scmp.ne.s32.totalorder %s256, %s258
      %p265 = scmp.eq.s32.totalorder %s38, 1
      %p266 = por %p264, %p265
      %p267 = scmp.ne.s32.totalorder %s258, %s259
      %p268 = scmp.eq.s32.totalorder %s38, 0
      %p269 = por %p267, %p268
      %p270 = scmp.ne.s32.totalorder %s258, %s259
      %p271 = scmp.eq.s32.totalorder %s39, 1
      %p272 = por %p270, %p271
      %p274 = scmp.ne.s32.totalorder %s259, %s273
      %p275 = scmp.eq.s32.totalorder %s39, 0
      %p276 = por %p274, %p275
      %s278 = sadd.s32 %s277, 1
      %p281 = scmp.eq.s32.totalorder %s33, 1
      %p282 = scmp.ne.s32.totalorder %s277, %s279
      %p283 = scmp.eq.s32.totalorder %s33, 0
      %p284 = por %p282, %p283
      %p285 = scmp.ne.s32.totalorder %s277, %s279
      %p286 = scmp.eq.s32.totalorder %s38, 1
      %p287 = por %p285, %p286
      %p288 = scmp.ne.s32.totalorder %s279, %s280
      %p289 = scmp.eq.s32.totalorder %s38, 0
      %p290 = por %p288, %p289
      %p291 = scmp.ne.s32.totalorder %s279, %s280
      %p292 = scmp.eq.s32.totalorder %s39, 1
      %p293 = por %p291, %p292
      %p295 = scmp.ne.s32.totalorder %s280, %s294
      %p296 = scmp.eq.s32.totalorder %s39, 0
      %p297 = por %p295, %p296
      %s299 = sadd.s32 %s298, 1
      %p302 = scmp.eq.s32.totalorder %s33, 1
      %p303 = scmp.ne.s32.totalorder %s298, %s300
      %p304 = scmp.eq.s32.totalorder %s33, 0
      %p305 = por %p303, %p304
      %p306 = scmp.ne.s32.totalorder %s298, %s300
      %p307 = scmp.eq.s32.totalorder %s38, 1
      %p308 = por %p306, %p307
      %p309 = scmp.ne.s32.totalorder %s300, %s301
      %p310 = scmp.eq.s32.totalorder %s38, 0
      %p311 = por %p309, %p310
      %p312 = scmp.ne.s32.totalorder %s300, %s301
      %p313 = scmp.eq.s32.totalorder %s39, 1
      %p314 = por %p312, %p313
      %p316 = scmp.ne.s32.totalorder %s301, %s315
      %p317 = scmp.eq.s32.totalorder %s39, 0
      %p318 = por %p316, %p317
      %s320 = sadd.s32 %s319, 1
      %p323 = scmp.eq.s32.totalorder %s33, 1
      %p324 = scmp.ne.s32.totalorder %s319, %s321
      %p325 = scmp.eq.s32.totalorder %s33, 0
      %p326 = por %p324, %p325
      %p327 = scmp.ne.s32.totalorder %s319, %s321
      %p328 = scmp.eq.s32.totalorder %s38, 1
      %p329 = por %p327, %p328
      %p330 = scmp.ne.s32.totalorder %s321, %s322
      %p331 = scmp.eq.s32.totalorder %s38, 0
      %p332 = por %p330, %p331
      %p333 = scmp.ne.s32.totalorder %s321, %s322
      %p334 = scmp.eq.s32.totalorder %s39, 1
      %p335 = por %p333, %p334
      %p337 = scmp.ne.s32.totalorder %s322, %s336
      %p338 = scmp.eq.s32.totalorder %s39, 0
      %p339 = por %p337, %p338
      %s340 = ssub.s32 %s33, %s40
      %p341 = scmp.eq.s32.totalorder %s340, 0
      %s343 = sadd.s32 %s342, 1
      %s344 = scalar_select %p341, %s342, %s343
      %p347 = pneg %p341
      %p348 = scmp.eq.s32.totalorder %s33, 1
      %p349 = por %p347, %p348
      %p350 = scmp.ne.s32.totalorder %s342, %s345
      %p351 = scmp.eq.s32.totalorder %s33, 0
      %p352 = por %p350, %p351
      %p353 = scmp.ne.s32.totalorder %s342, %s345
      %p354 = scmp.eq.s32.totalorder %s38, 1
      %p355 = por %p353, %p354
      %p356 = scmp.ne.s32.totalorder %s345, %s346
      %p357 = scmp.eq.s32.totalorder %s38, 0
      %p358 = por %p356, %p357
      %p359 = scmp.ne.s32.totalorder %s345, %s346
      %p360 = scmp.eq.s32.totalorder %s39, 1
      %p361 = por %p359, %p360
      %p363 = scmp.ne.s32.totalorder %s346, %s362
      %p364 = scmp.eq.s32.totalorder %s39, 0
      %p365 = por %p363, %p364
      %p366 = scmp.le.s32.totalorder 1, %s33
      %p367 = scmp.lt.s32.totalorder %s33, 3
      %p368 = pnand %p366, %p367
      %p369 = pneg %p368
      // Predicated region
      $region9: #{gpt_forward.2} parent=5 // pred_check
        _
      $region10: #{gpt_forward.2} parent=5 // pred_check_branch
        %371 = sbr.rel (%p368) target = $region12
      $region11: #{gpt_forward.2} parent=5 // pred_region
        %s372 = ssub.s32 %s33, 1
        // Predicated region
        $region13: #{gpt_forward.2} parent=11 // pred_check
          %p373 = pneg %p80
        $region14: #{gpt_forward.2} parent=11 // pred_check_branch
          %375 = sbr.rel (%p373) target = $region16
        $region15: #{gpt_forward.2} parent=11 // pred_region
          %s377 = ssub.s32 512, 512
          %378 = vsyncadd [#allocation6], %s377
          %s379 = sshll.u32 [#allocation5], 4
          %s380 = int_to_ptr.vmem [resolvable:$true] %s379
          %385 = dma.hbm_to_vmem [thread:$0]  %s1, 512, %s380, [#allocation6], 128, 128, 8
        $region16: #{gpt_forward.2} parent=11 // pred_fallthru
          _
        // Predicated region
        $region17: #{gpt_forward.2} parent=11 // pred_check
          %p386 = pneg %p101
        $region18: #{gpt_forward.2} parent=11 // pred_check_branch
          %388 = sbr.rel (%p386) target = $region20
        $region19: #{gpt_forward.2} parent=11 // pred_region
          %s390 = ssub.s32 512, 512
          %391 = vsyncadd [#allocation6], %s390
          %s392 = sshll.u32 [#allocation7], 4
          %s393 = int_to_ptr.vmem [resolvable:$true] %s392
          %398 = dma.hbm_to_vmem [thread:$0]  %s2, 512, %s393, [#allocation6], 128, 128, 8
        $region20: #{gpt_forward.2} parent=11 // pred_fallthru
          _
        // Predicated region
        $region21: #{gpt_forward.2} parent=11 // pred_check
          %p399 = pneg %p122
        $region22: #{gpt_forward.2} parent=11 // pred_check_branch
          %401 = sbr.rel (%p399) target = $region24
        $region23: #{gpt_forward.2} parent=11 // pred_region
          %s403 = ssub.s32 512, 512
          %404 = vsyncadd [#allocation9], %s403
          %s405 = sshll.u32 [#allocation8], 4
          %s406 = int_to_ptr.vmem [resolvable:$true] %s405
          %411 = dma.hbm_to_vmem [thread:$0]  %s3, 512, %s406, [#allocation9], 128, 128, 8
        $region24: #{gpt_forward.2} parent=11 // pred_fallthru
          _
        // Predicated region
        $region25: #{gpt_forward.2} parent=11 // pred_check
          %p412 = pneg %p143
        $region26: #{gpt_forward.2} parent=11 // pred_check_branch
          %414 = sbr.rel (%p412) target = $region28
        $region27: #{gpt_forward.2} parent=11 // pred_region
          %s416 = ssub.s32 256, 256
          %417 = vsyncadd [#allocation9], %s416
          %s418 = sshll.u32 [#allocation10], 4
          %s419 = int_to_ptr.vmem [resolvable:$true] %s418
          %424 = dma.hbm_to_vmem [thread:$0]  %s4, 256, %s419, [#allocation9], 128, 128, 8
        $region28: #{gpt_forward.2} parent=11 // pred_fallthru
          _
        // Predicated region
        $region29: #{gpt_forward.2} parent=11 // pred_check
          %p425 = pneg %p164
        $region30: #{gpt_forward.2} parent=11 // pred_check_branch
          %427 = sbr.rel (%p425) target = $region32
        $region31: #{gpt_forward.2} parent=11 // pred_region
          %s429 = ssub.s32 16, 16
          %430 = vsyncadd [#allocation12], %s429
          %s432 = sshll.u32 [#allocation11], 4
          %s433 = int_to_ptr.vmem [resolvable:$true] %s432
          %435 = dma.hbm_to_vmem [thread:$0]  %s5, 16, %s433, [#allocation12]
        $region32: #{gpt_forward.2} parent=11 // pred_fallthru
          _
        // Predicated region
        $region33: #{gpt_forward.2} parent=11 // pred_check
          %p436 = pneg %p185
        $region34: #{gpt_forward.2} parent=11 // pred_check_branch
          %438 = sbr.rel (%p436) target = $region36
        $region35: #{gpt_forward.2} parent=11 // pred_region
          %s440 = ssub.s32 16, 16
          %441 = vsyncadd [#allocation12], %s440
          %s443 = sshll.u32 [#allocation13], 4
          %s444 = int_to_ptr.vmem [resolvable:$true] %s443
          %446 = dma.hbm_to_vmem [thread:$0]  %s6, 16, %s444, [#allocation12]
        $region36: #{gpt_forward.2} parent=11 // pred_fallthru
          _
        // Predicated region
        $region37: #{gpt_forward.2} parent=11 // pred_check
          %p447 = pneg %p206
        $region38: #{gpt_forward.2} parent=11 // pred_check_branch
          %449 = sbr.rel (%p447) target = $region40
        $region39: #{gpt_forward.2} parent=11 // pred_region
          %s451 = ssub.s32 16, 16
          %452 = vsyncadd [#allocation15], %s451
          %s454 = sshll.u32 [#allocation14], 4
          %s455 = int_to_ptr.vmem [resolvable:$true] %s454
          %457 = dma.hbm_to_vmem [thread:$0]  %s7, 16, %s455, [#allocation15]
        $region40: #{gpt_forward.2} parent=11 // pred_fallthru
          _
        // Predicated region
        $region41: #{gpt_forward.2} parent=11 // pred_check
          %p458 = pneg %p227
        $region42: #{gpt_forward.2} parent=11 // pred_check_branch
          %460 = sbr.rel (%p458) target = $region44
        $region43: #{gpt_forward.2} parent=11 // pred_region
          %s462 = ssub.s32 512, 512
          %463 = vsyncadd [#allocation15], %s462
          %s464 = sshll.u32 [#allocation16], 4
          %s465 = int_to_ptr.vmem [resolvable:$true] %s464
          %470 = dma.hbm_to_vmem [thread:$0]  %s8, 512, %s465, [#allocation15], 128, 128, 8
        $region44: #{gpt_forward.2} parent=11 // pred_fallthru
          _
        // Predicated region
        $region45: #{gpt_forward.2} parent=11 // pred_check
          %p471 = pneg %p248
        $region46: #{gpt_forward.2} parent=11 // pred_check_branch
          %473 = sbr.rel (%p471) target = $region48
        $region47: #{gpt_forward.2} parent=11 // pred_region
          %s475 = ssub.s32 16, 16
          %476 = vsyncadd [#allocation18], %s475
          %s478 = sshll.u32 [#allocation17], 4
          %s479 = int_to_ptr.vmem [resolvable:$true] %s478
          %481 = dma.hbm_to_vmem [thread:$0]  %s9, 16, %s479, [#allocation18]
        $region48: #{gpt_forward.2} parent=11 // pred_fallthru
          _
        // Predicated region
        $region49: #{gpt_forward.2} parent=11 // pred_check
          %p482 = pneg %p269
        $region50: #{gpt_forward.2} parent=11 // pred_check_branch
          %484 = sbr.rel (%p482) target = $region52
        $region51: #{gpt_forward.2} parent=11 // pred_region
          %s486 = ssub.s32 2048, 2048
          %487 = vsyncadd [#allocation18], %s486
          %s488 = sshll.u32 [#allocation19], 4
          %s489 = int_to_ptr.vmem [resolvable:$true] %s488
          %494 = dma.hbm_to_vmem [thread:$0]  %s10, 2048, %s489, [#allocation18], 128, 128, 8
        $region52: #{gpt_forward.2} parent=11 // pred_fallthru
          _
        // Predicated region
        $region53: #{gpt_forward.2} parent=11 // pred_check
          %p495 = pneg %p290
        $region54: #{gpt_forward.2} parent=11 // pred_check_branch
          %497 = sbr.rel (%p495) target = $region56
        $region55: #{gpt_forward.2} parent=11 // pred_region
          %s499 = ssub.s32 16, 16
          %500 = vsyncadd [#allocation21], %s499
          %s502 = sshll.u32 [#allocation20], 4
          %s503 = int_to_ptr.vmem [resolvable:$true] %s502
          %505 = dma.hbm_to_vmem [thread:$0]  %s11, 16, %s503, [#allocation21]
        $region56: #{gpt_forward.2} parent=11 // pred_fallthru
          _
        // Predicated region
        $region57: #{gpt_forward.2} parent=11 // pred_check
          %p506 = pneg %p311
        $region58: #{gpt_forward.2} parent=11 // pred_check_branch
          %508 = sbr.rel (%p506) target = $region60
        $region59: #{gpt_forward.2} parent=11 // pred_region
          %s510 = ssub.s32 16, 16
          %511 = vsyncadd [#allocation21], %s510
          %s513 = sshll.u32 [#allocation22], 4
          %s514 = int_to_ptr.vmem [resolvable:$true] %s513
          %516 = dma.hbm_to_vmem [thread:$0]  %s12, 16, %s514, [#allocation21]
        $region60: #{gpt_forward.2} parent=11 // pred_fallthru
          _
        // Predicated region
        $region61: #{gpt_forward.2} parent=11 // pred_check
          %p517 = pneg %p332
        $region62: #{gpt_forward.2} parent=11 // pred_check_branch
          %519 = sbr.rel (%p517) target = $region64
        $region63: #{gpt_forward.2} parent=11 // pred_region
          %s521 = ssub.s32 16, 16
          %522 = vsyncadd [#allocation24], %s521
          %s524 = sshll.u32 [#allocation23], 4
          %s525 = int_to_ptr.vmem [resolvable:$true] %s524
          %527 = dma.hbm_to_vmem [thread:$0]  %s13, 16, %s525, [#allocation24]
        $region64: #{gpt_forward.2} parent=11 // pred_fallthru
          _
      $region12: #{gpt_forward.2} parent=5 // pred_fallthru
        _
      %p528 = scmp.lt.s32.totalorder %s33, 2
      // Predicated region
      $region65: #{gpt_forward.2} parent=5 // pred_check
        %p529 = pneg %p528
      $region66: #{gpt_forward.2} parent=5 // pred_check_branch
        %531 = sbr.rel (%p529) target = $region68
      $region67: #{gpt_forward.2} parent=5 // pred_region
        // Predicated region
        $region69: #{gpt_forward.2} parent=67 // pred_check
          %p532 = pneg %p53
        $region70: #{gpt_forward.2} parent=67 // pred_check_branch
          %534 = sbr.rel (%p532) target = $region72
        $region71: #{gpt_forward.2} parent=67 // pred_region
          %s535 = sand.u32 %s43, 1
          %s536 = scalar_lea.sflag [#allocation3], %s535
          %s537 = sand.u32 %s43, 1
          %s538 = smul.addr %s537, 8
          %s539 = scalar_lea.vmem [#allocation2], %s538
          %s541 = ssub.s32 128, 128
          %542 = vsyncadd %s536, %s541
          %s543 = smul.addr %s33, 128
          %s544 = scalar_lea.hbm %s0, %s543
          %s546 = sshll.u32 %s539, 4
          %s547 = int_to_ptr.vmem [resolvable:$true] %s546
          %549 = dma.hbm_to_vmem [thread:$0]  %s544, 128, %s547, %s536
        $region72: #{gpt_forward.2} parent=67 // pred_fallthru
          _
      $region68: #{gpt_forward.2} parent=5 // pred_fallthru
        _
      %p550 = scmp.le.s32.totalorder 1, %s33
      %p551 = scmp.lt.s32.totalorder %s33, 3
      %p552 = pnand %p550, %p551
      %p553 = pneg %p552
      // Predicated region
      $region73: #{gpt_forward.2} parent=5 // pred_check
        _
      $region74: #{gpt_forward.2} parent=5 // pred_check_branch
        %555 = sbr.rel (%p552) target = $region76
      $region75: #{gpt_forward.2} parent=5 // pred_region
        %s556 = ssub.s32 %s33, 1
        %s557 = sand.u32 %s46, 1
        %s558 = scalar_lea.sflag [#allocation3], %s557
        %s559 = sand.u32 %s46, 1
        %s560 = smul.addr %s559, 8
        %s561 = scalar_lea.vmem [#allocation2], %s560
        // Predicated region
        $region77: #{gpt_forward.2} parent=75 // pred_check
          %p562 = pneg %p59
        $region78: #{gpt_forward.2} parent=75 // pred_check_branch
          %564 = sbr.rel (%p562) target = $region80
        $region79: #{gpt_forward.2} parent=75 // pred_region
          %565 = dma.done %s558, 128
        $region80: #{gpt_forward.2} parent=75 // pred_fallthru
          _
        // Predicated region
        $region81: #{gpt_forward.2} parent=75 // pred_check
          %p566 = pneg %p80
        $region82: #{gpt_forward.2} parent=75 // pred_check_branch
          %568 = sbr.rel (%p566) target = $region84
        $region83: #{gpt_forward.2} parent=75 // pred_region
          %569 = dma.done [#allocation6], 512
        $region84: #{gpt_forward.2} parent=75 // pred_fallthru
          _
        // Predicated region
        $region85: #{gpt_forward.2} parent=75 // pred_check
          %p570 = pneg %p101
        $region86: #{gpt_forward.2} parent=75 // pred_check_branch
          %572 = sbr.rel (%p570) target = $region88
        $region87: #{gpt_forward.2} parent=75 // pred_region
          %573 = dma.done [#allocation6], 512
        $region88: #{gpt_forward.2} parent=75 // pred_fallthru
          _
        // Predicated region
        $region89: #{gpt_forward.2} parent=75 // pred_check
          %p574 = pneg %p122
        $region90: #{gpt_forward.2} parent=75 // pred_check_branch
          %576 = sbr.rel (%p574) target = $region92
        $region91: #{gpt_forward.2} parent=75 // pred_region
          %577 = dma.done [#allocation9], 512
        $region92: #{gpt_forward.2} parent=75 // pred_fallthru
          _
        // Predicated region
        $region93: #{gpt_forward.2} parent=75 // pred_check
          %p578 = pneg %p143
        $region94: #{gpt_forward.2} parent=75 // pred_check_branch
          %580 = sbr.rel (%p578) target = $region96
        $region95: #{gpt_forward.2} parent=75 // pred_region
          %581 = dma.done [#allocation9], 256
        $region96: #{gpt_forward.2} parent=75 // pred_fallthru
          _
        // Predicated region
        $region97: #{gpt_forward.2} parent=75 // pred_check
          %p582 = pneg %p164
        $region98: #{gpt_forward.2} parent=75 // pred_check_branch
          %584 = sbr.rel (%p582) target = $region100
        $region99: #{gpt_forward.2} parent=75 // pred_region
          %585 = dma.done [#allocation12], 16
        $region100: #{gpt_forward.2} parent=75 // pred_fallthru
          _
        // Predicated region
        $region101: #{gpt_forward.2} parent=75 // pred_check
          %p586 = pneg %p185
        $region102: #{gpt_forward.2} parent=75 // pred_check_branch
          %588 = sbr.rel (%p586) target = $region104
        $region103: #{gpt_forward.2} parent=75 // pred_region
          %589 = dma.done [#allocation12], 16
        $region104: #{gpt_forward.2} parent=75 // pred_fallthru
          _
        // Predicated region
        $region105: #{gpt_forward.2} parent=75 // pred_check
          %p590 = pneg %p206
        $region106: #{gpt_forward.2} parent=75 // pred_check_branch
          %592 = sbr.rel (%p590) target = $region108
        $region107: #{gpt_forward.2} parent=75 // pred_region
          %593 = dma.done [#allocation15], 16
        $region108: #{gpt_forward.2} parent=75 // pred_fallthru
          _
        // Predicated region
        $region109: #{gpt_forward.2} parent=75 // pred_check
          %p594 = pneg %p227
        $region110: #{gpt_forward.2} parent=75 // pred_check_branch
          %596 = sbr.rel (%p594) target = $region112
        $region111: #{gpt_forward.2} parent=75 // pred_region
          %597 = dma.done [#allocation15], 512
        $region112: #{gpt_forward.2} parent=75 // pred_fallthru
          _
        // Predicated region
        $region113: #{gpt_forward.2} parent=75 // pred_check
          %p598 = pneg %p248
        $region114: #{gpt_forward.2} parent=75 // pred_check_branch
          %600 = sbr.rel (%p598) target = $region116
        $region115: #{gpt_forward.2} parent=75 // pred_region
          %601 = dma.done [#allocation18], 16
        $region116: #{gpt_forward.2} parent=75 // pred_fallthru
          _
        // Predicated region
        $region117: #{gpt_forward.2} parent=75 // pred_check
          %p602 = pneg %p269
        $region118: #{gpt_forward.2} parent=75 // pred_check_branch
          %604 = sbr.rel (%p602) target = $region120
        $region119: #{gpt_forward.2} parent=75 // pred_region
          %605 = dma.done [#allocation18], 2048
        $region120: #{gpt_forward.2} parent=75 // pred_fallthru
          _
        // Predicated region
        $region121: #{gpt_forward.2} parent=75 // pred_check
          %p606 = pneg %p290
        $region122: #{gpt_forward.2} parent=75 // pred_check_branch
          %608 = sbr.rel (%p606) target = $region124
        $region123: #{gpt_forward.2} parent=75 // pred_region
          %609 = dma.done [#allocation21], 16
        $region124: #{gpt_forward.2} parent=75 // pred_fallthru
          _
        // Predicated region
        $region125: #{gpt_forward.2} parent=75 // pred_check
          %p610 = pneg %p311
        $region126: #{gpt_forward.2} parent=75 // pred_check_branch
          %612 = sbr.rel (%p610) target = $region128
        $region127: #{gpt_forward.2} parent=75 // pred_region
          %613 = dma.done [#allocation21], 16
        $region128: #{gpt_forward.2} parent=75 // pred_fallthru
          _
        // Predicated region
        $region129: #{gpt_forward.2} parent=75 // pred_check
          %p614 = pneg %p332
        $region130: #{gpt_forward.2} parent=75 // pred_check_branch
          %616 = sbr.rel (%p614) target = $region132
        $region131: #{gpt_forward.2} parent=75 // pred_region
          %617 = dma.done [#allocation24], 16
        $region132: #{gpt_forward.2} parent=75 // pred_fallthru
          _
        %s618 = sand.u32 %s46, 1
        %s619 = scalar_lea.sflag [#allocation3], %s618
        %s620 = sand.u32 %s46, 1
        %s621 = smul.addr %s620, 8
        %s622 = scalar_lea.vmem [#allocation2], %s621
        %p623 = pneg %p59
        %p624 = pneg %p56
        %p625 = pneg %p80
        %p626 = pneg %p77
        %p627 = pneg %p101
        %p628 = pneg %p98
        %p629 = pneg %p122
        %p630 = pneg %p119
        %p631 = pneg %p143
        %p632 = pneg %p140
        %p633 = pneg %p164
        %p634 = pneg %p161
        %p635 = pneg %p185
        %p636 = pneg %p182
        %p637 = pneg %p206
        %p638 = pneg %p203
        %p639 = pneg %p227
        %p640 = pneg %p224
        %p641 = pneg %p248
        %p642 = pneg %p245
        %p643 = pneg %p269
        %p644 = pneg %p266
        %p645 = pneg %p290
        %p646 = pneg %p287
        %p647 = pneg %p311
        %p648 = pneg %p308
        %p649 = pneg %p332
        %p650 = pneg %p329
        %p651 = pneg %p358
        %p652 = pneg %p355
        %s653 = sand.u32 %s345, 1
        %s654 = scalar_lea.sflag [#allocation4], %s653
        %s655 = sand.u32 %s345, 1
        %s656 = smul.addr %s655, 8
        %s657 = scalar_lea.vmem [#allocation25], %s656
        %v658 = vld [vmem:[%s561] sm:$0xff]
        %v659 = vld [vmem:[#allocation5] sm:$0xff]
        %v660 = vld [vmem:[#allocation5 + $0x8] sm:$0xff]
        %v661 = vld [vmem:[#allocation5 + $0x10] sm:$0xff]
        %v662 = vld [vmem:[#allocation5 + $0x18] sm:$0xff]
        %vm663 = vcmask 261120
        %v665 = vsel %vm663, %v658, 0
        %667 = vmatprep.subr.mxu0 0.0
        %668 = vmatpush1.msra.mxu0 %v659
        %669 = vmatprep.subr.mxu0 0.0
        %670 = vmatpush1.msra.mxu0 %v660
        %671 = vmatprep.subr.mxu0 0.0
        %672 = vmatpush1.msra.mxu0 %v661
        %673 = vmatprep.subr.mxu0 0.0
        %674 = vmatpush1.msra.mxu0 %v662
        %675 = vmatprep.subr.mxu0 0.0
        %676 = vmatpush1.msra.mxu0 0.0
        %677 = vmatprep.subr.mxu0 0.0
        %678 = vmatpush1.msra.mxu0 0.0
        %679 = vmatprep.subr.mxu0 0.0
        %680 = vmatpush1.msra.mxu0 0.0
        %681 = vmatprep.subr.mxu0 0.0
        %682 = vmatpush1.msra.mxu0 0.0
        %683 = vmatprep.subr.mxu0 0.0
        %684 = vmatpush1.msra.mxu0 0.0
        %685 = vmatprep.subr.mxu0 0.0
        %686 = vmatpush1.msra.mxu0 0.0
        %687 = vmatprep.subr.mxu0 0.0
        %688 = vmatpush1.msra.mxu0 0.0
        %689 = vmatprep.subr.mxu0 0.0
        %690 = vmatpush1.msra.mxu0 0.0
        %691 = vmatprep.subr.mxu0 0.0
        %692 = vmatpush1.msra.mxu0 0.0
        %693 = vmatprep.subr.mxu0 0.0
        %694 = vmatpush1.msra.mxu0 0.0
        %695 = vmatprep.subr.mxu0 0.0
        %696 = vmatpush1.msra.mxu0 0.0
        %697 = vmatprep.subr.mxu0 0.0
        %698 = vmatpush1.msra.mxu0 0.0
        %699 = vmatprep.subr.mxu0 0.0
        %700 = vmatpush1.msra.mxu0 0.0
        %701 = vmatprep.subr.mxu0 0.0
        %702 = vmatpush1.msra.mxu0 0.0
        %703 = vmatprep.subr.mxu0 0.0
        %704 = vmatpush1.msra.mxu0 0.0
        %705 = vmatprep.subr.mxu0 0.0
        %706 = vmatpush1.msra.mxu0 0.0
        %707 = vmatprep.subr.mxu0 0.0
        %708 = vmatpush1.msra.mxu0 0.0
        %709 = vmatprep.subr.mxu0 0.0
        %710 = vmatpush1.msra.mxu0 0.0
        %711 = vmatprep.subr.mxu0 0.0
        %712 = vmatpush1.msra.mxu0 0.0
        %713 = vmatprep.subr.mxu0 0.0
        %714 = vmatpush1.msra.mxu0 0.0
        %715 = vmatprep.subr.mxu0 0.0
        %716 = vmatpush1.msra.mxu0 0.0
        %717 = vmatprep.subr.mxu0 0.0
        %718 = vmatpush1.msra.mxu0 0.0
        %719 = vmatprep.subr.mxu0 0.0
        %720 = vmatpush1.msra.mxu0 0.0
        %721 = vmatprep.subr.mxu0 0.0
        %722 = vmatpush1.msra.mxu0 0.0
        %723 = vmatprep.subr.mxu0 0.0
        %724 = vmatpush1.msra.mxu0 0.0
        %725 = vmatprep.subr.mxu0 0.0
        %726 = vmatpush1.msra.mxu0 0.0
        %727 = vmatprep.subr.mxu0 0.0
        %728 = vmatpush1.msra.mxu0 0.0
        %729 = vmatprep.subr.mxu0 0.0
        %730 = vmatpush1.msra.mxu0 0.0
        %731 = vmatprep.mubr.f32.mxu0 0.0
        %732 = vmatmul.mubr.f32.gmra.mrb[0].mxu0 %v665
        %v733 = vpop.f32.mrb[0].mxu0
        %v734 = vadd.f32 0.0, %v733
        %v735 = vpop.f32.mrb[0].mxu0
        %736 = vdwg.mxu0
        %v737 = vmul.f32 %v734, 0.17677669
        %v738 = vld [vmem:[#allocation7] sm:$0xff]
        %v739 = vld [vmem:[#allocation7 + $0x8] sm:$0xff]
        %v740 = vld [vmem:[#allocation7 + $0x10] sm:$0xff]
        %v741 = vld [vmem:[#allocation7 + $0x18] sm:$0xff]
        %742 = vmatprep.subr.mxu0 0.0
        %743 = vmatpush1.msra.mxu0 %v738
        %744 = vmatprep.subr.mxu0 0.0
        %745 = vmatpush1.msra.mxu0 %v739
        %746 = vmatprep.subr.mxu0 0.0
        %747 = vmatpush1.msra.mxu0 %v740
        %748 = vmatprep.subr.mxu0 0.0
        %749 = vmatpush1.msra.mxu0 %v741
        %750 = vmatprep.subr.mxu0 0.0
        %751 = vmatpush1.msra.mxu0 0.0
        %752 = vmatprep.subr.mxu0 0.0
        %753 = vmatpush1.msra.mxu0 0.0
        %754 = vmatprep.subr.mxu0 0.0
        %755 = vmatpush1.msra.mxu0 0.0
        %756 = vmatprep.subr.mxu0 0.0
        %757 = vmatpush1.msra.mxu0 0.0
        %758 = vmatprep.subr.mxu0 0.0
        %759 = vmatpush1.msra.mxu0 0.0
        %760 = vmatprep.subr.mxu0 0.0
        %761 = vmatpush1.msra.mxu0 0.0
        %762 = vmatprep.subr.mxu0 0.0
        %763 = vmatpush1.msra.mxu0 0.0
        %764 = vmatprep.subr.mxu0 0.0
        %765 = vmatpush1.msra.mxu0 0.0
        %766 = vmatprep.subr.mxu0 0.0
        %767 = vmatpush1.msra.mxu0 0.0
        %768 = vmatprep.subr.mxu0 0.0
        %769 = vmatpush1.msra.mxu0 0.0
        %770 = vmatprep.subr.mxu0 0.0
        %771 = vmatpush1.msra.mxu0 0.0
        %772 = vmatprep.subr.mxu0 0.0
        %773 = vmatpush1.msra.mxu0 0.0
        %774 = vmatprep.subr.mxu0 0.0
        %775 = vmatpush1.msra.mxu0 0.0
        %776 = vmatprep.subr.mxu0 0.0
        %777 = vmatpush1.msra.mxu0 0.0
        %778 = vmatprep.subr.mxu0 0.0
        %779 = vmatpush1.msra.mxu0 0.0
        %780 = vmatprep.subr.mxu0 0.0
        %781 = vmatpush1.msra.mxu0 0.0
        %782 = vmatprep.subr.mxu0 0.0
        %783 = vmatpush1.msra.mxu0 0.0
        %784 = vmatprep.subr.mxu0 0.0
        %785 = vmatpush1.msra.mxu0 0.0
        %786 = vmatprep.subr.mxu0 0.0
        %787 = vmatpush1.msra.mxu0 0.0
        %788 = vmatprep.subr.mxu0 0.0
        %789 = vmatpush1.msra.mxu0 0.0
        %790 = vmatprep.subr.mxu0 0.0
        %791 = vmatpush1.msra.mxu0 0.0
        %792 = vmatprep.subr.mxu0 0.0
        %793 = vmatpush1.msra.mxu0 0.0
        %794 = vmatprep.subr.mxu0 0.0
        %795 = vmatpush1.msra.mxu0 0.0
        %796 = vmatprep.subr.mxu0 0.0
        %797 = vmatpush1.msra.mxu0 0.0
        %798 = vmatprep.subr.mxu0 0.0
        %799 = vmatpush1.msra.mxu0 0.0
        %800 = vmatprep.subr.mxu0 0.0
        %801 = vmatpush1.msra.mxu0 0.0
        %802 = vmatprep.subr.mxu0 0.0
        %803 = vmatpush1.msra.mxu0 0.0
        %804 = vmatprep.subr.mxu0 0.0
        %805 = vmatpush1.msra.mxu0 0.0
        %806 = vmatprep.mubr.f32.mxu0 0.0
        %807 = vmatmul.mubr.f32.gmra.mrb[0].mxu0 %v665
        %v808 = vpop.f32.mrb[0].mxu0
        %v809 = vadd.f32 0.0, %v808
        %v810 = vpop.f32.mrb[0].mxu0
        %811 = vdwg.mxu0
        %v812 = vld [vmem:[#allocation8] sm:$0xff]
        %v813 = vld [vmem:[#allocation8 + $0x8] sm:$0xff]
        %v814 = vld [vmem:[#allocation8 + $0x10] sm:$0xff]
        %v815 = vld [vmem:[#allocation8 + $0x18] sm:$0xff]
        %816 = vmatprep.subr.mxu0 0.0
        %817 = vmatpush1.msra.mxu0 %v812
        %818 = vmatprep.subr.mxu0 0.0
        %819 = vmatpush1.msra.mxu0 %v813
        %820 = vmatprep.subr.mxu0 0.0
        %821 = vmatpush1.msra.mxu0 %v814
        %822 = vmatprep.subr.mxu0 0.0
        %823 = vmatpush1.msra.mxu0 %v815
        %824 = vmatprep.subr.mxu0 0.0
        %825 = vmatpush1.msra.mxu0 0.0
        %826 = vmatprep.subr.mxu0 0.0
        %827 = vmatpush1.msra.mxu0 0.0
        %828 = vmatprep.subr.mxu0 0.0
        %829 = vmatpush1.msra.mxu0 0.0
        %830 = vmatprep.subr.mxu0 0.0
        %831 = vmatpush1.msra.mxu0 0.0
        %832 = vmatprep.subr.mxu0 0.0
        %833 = vmatpush1.msra.mxu0 0.0
        %834 = vmatprep.subr.mxu0 0.0
        %835 = vmatpush1.msra.mxu0 0.0
        %836 = vmatprep.subr.mxu0 0.0
        %837 = vmatpush1.msra.mxu0 0.0
        %838 = vmatprep.subr.mxu0 0.0
        %839 = vmatpush1.msra.mxu0 0.0
        %840 = vmatprep.subr.mxu0 0.0
        %841 = vmatpush1.msra.mxu0 0.0
        %842 = vmatprep.subr.mxu0 0.0
        %843 = vmatpush1.msra.mxu0 0.0
        %844 = vmatprep.subr.mxu0 0.0
        %845 = vmatpush1.msra.mxu0 0.0
        %846 = vmatprep.subr.mxu0 0.0
        %847 = vmatpush1.msra.mxu0 0.0
        %848 = vmatprep.subr.mxu0 0.0
        %849 = vmatpush1.msra.mxu0 0.0
        %850 = vmatprep.subr.mxu0 0.0
        %851 = vmatpush1.msra.mxu0 0.0
        %852 = vmatprep.subr.mxu0 0.0
        %853 = vmatpush1.msra.mxu0 0.0
        %854 = vmatprep.subr.mxu0 0.0
        %855 = vmatpush1.msra.mxu0 0.0
        %856 = vmatprep.subr.mxu0 0.0
        %857 = vmatpush1.msra.mxu0 0.0
        %858 = vmatprep.subr.mxu0 0.0
        %859 = vmatpush1.msra.mxu0 0.0
        %860 = vmatprep.subr.mxu0 0.0
        %861 = vmatpush1.msra.mxu0 0.0
        %862 = vmatprep.subr.mxu0 0.0
        %863 = vmatpush1.msra.mxu0 0.0
        %864 = vmatprep.subr.mxu0 0.0
        %865 = vmatpush1.msra.mxu0 0.0
        %866 = vmatprep.subr.mxu0 0.0
        %867 = vmatpush1.msra.mxu0 0.0
        %868 = vmatprep.subr.mxu0 0.0
        %869 = vmatpush1.msra.mxu0 0.0
        %870 = vmatprep.subr.mxu0 0.0
        %871 = vmatpush1.msra.mxu0 0.0
        %872 = vmatprep.subr.mxu0 0.0
        %873 = vmatpush1.msra.mxu0 0.0
        %874 = vmatprep.subr.mxu0 0.0
        %875 = vmatpush1.msra.mxu0 0.0
        %876 = vmatprep.subr.mxu0 0.0
        %877 = vmatpush1.msra.mxu0 0.0
        %878 = vmatprep.subr.mxu0 0.0
        %879 = vmatpush1.msra.mxu0 0.0
        %880 = vmatprep.mubr.f32.mxu0 0.0
        %881 = vmatmul.mubr.f32.gmra.mrb[0].mxu0 %v665
        %v882 = vpop.f32.mrb[0].mxu0
        %v883 = vadd.f32 0.0, %v882
        %v884 = vpop.f32.mrb[0].mxu0
        %885 = vdwg.mxu0
        %vm886 = vcmask 130048
        %v888 = vsel %vm886, %v737, 0
        %v891 = vsel %vm886, %v809, 0
        %893 = vmatprep.subr.mxu0 0.0
        %894 = vmatpush1.xpose.msra.mxu0 %v891
        %895 = vmatprep.subr.mxu0 0.0
        %896 = vmatpush1.xpose.msra.mxu0 0.0
        %897 = vmatprep.subr.mxu0 0.0
        %898 = vmatpush1.xpose.msra.mxu0 0.0
        %899 = vmatprep.subr.mxu0 0.0
        %900 = vmatpush1.xpose.msra.mxu0 0.0
        %901 = vmatprep.subr.mxu0 0.0
        %902 = vmatpush1.xpose.msra.mxu0 0.0
        %903 = vmatprep.subr.mxu0 0.0
        %904 = vmatpush1.xpose.msra.mxu0 0.0
        %905 = vmatprep.subr.mxu0 0.0
        %906 = vmatpush1.xpose.msra.mxu0 0.0
        %907 = vmatprep.subr.mxu0 0.0
        %908 = vmatpush1.xpose.msra.mxu0 0.0
        %909 = vmatprep.subr.mxu0 0.0
        %910 = vmatpush1.xpose.msra.mxu0 0.0
        %911 = vmatprep.subr.mxu0 0.0
        %912 = vmatpush1.xpose.msra.mxu0 0.0
        %913 = vmatprep.subr.mxu0 0.0
        %914 = vmatpush1.xpose.msra.mxu0 0.0
        %915 = vmatprep.subr.mxu0 0.0
        %916 = vmatpush1.xpose.msra.mxu0 0.0
        %917 = vmatprep.subr.mxu0 0.0
        %918 = vmatpush1.xpose.msra.mxu0 0.0
        %919 = vmatprep.subr.mxu0 0.0
        %920 = vmatpush1.xpose.msra.mxu0 0.0
        %921 = vmatprep.subr.mxu0 0.0
        %922 = vmatpush1.xpose.msra.mxu0 0.0
        %923 = vmatprep.subr.mxu0 0.0
        %924 = vmatpush1.xpose.msra.mxu0 0.0
        %925 = vmatprep.subr.mxu0 0.0
        %926 = vmatpush1.xpose.msra.mxu0 0.0
        %927 = vmatprep.subr.mxu0 0.0
        %928 = vmatpush1.xpose.msra.mxu0 0.0
        %929 = vmatprep.subr.mxu0 0.0
        %930 = vmatpush1.xpose.msra.mxu0 0.0
        %931 = vmatprep.subr.mxu0 0.0
        %932 = vmatpush1.xpose.msra.mxu0 0.0
        %933 = vmatprep.subr.mxu0 0.0
        %934 = vmatpush1.xpose.msra.mxu0 0.0
        %935 = vmatprep.subr.mxu0 0.0
        %936 = vmatpush1.xpose.msra.mxu0 0.0
        %937 = vmatprep.subr.mxu0 0.0
        %938 = vmatpush1.xpose.msra.mxu0 0.0
        %939 = vmatprep.subr.mxu0 0.0
        %940 = vmatpush1.xpose.msra.mxu0 0.0
        %941 = vmatprep.subr.mxu0 0.0
        %942 = vmatpush1.xpose.msra.mxu0 0.0
        %943 = vmatprep.subr.mxu0 0.0
        %944 = vmatpush1.xpose.msra.mxu0 0.0
        %945 = vmatprep.subr.mxu0 0.0
        %946 = vmatpush1.xpose.msra.mxu0 0.0
        %947 = vmatprep.subr.mxu0 0.0
        %948 = vmatpush1.xpose.msra.mxu0 0.0
        %949 = vmatprep.subr.mxu0 0.0
        %950 = vmatpush1.xpose.msra.mxu0 0.0
        %951 = vmatprep.subr.mxu0 0.0
        %952 = vmatpush1.xpose.msra.mxu0 0.0
        %953 = vmatprep.subr.mxu0 0.0
        %954 = vmatpush1.xpose.msra.mxu0 0.0
        %955 = vmatprep.subr.mxu0 0.0
        %956 = vmatpush1.xpose.msra.mxu0 0.0
        %957 = vmatprep.mubr.f32.mxu0 0.0
        %958 = vmatmul.mubr.f32.gmra.mrb[0].mxu0 %v888
        %v959 = vpop.f32.mrb[0].mxu0
        %v960 = vadd.f32 0.0, %v959
        %v961 = vpop.f32.mrb[0].mxu0
        %962 = vdwg.mxu0
        %v963 = vlaneseq
        %v964 = vshrl.u32 %v963, 7
        %v965 = vlaneseq
        %v966 = vand.u32 %v965, 127
        %vm967 = vcmp.ge.s32.totalorder %v964, %v966
        %v968 = vsel %vm967, %v960, -1e+30
        %vm969 = vcmask 64512
        %v970 = vsel %vm969, %v968, -inf
        %971 = vmax.xlane.f32.xlu0 %v970
        %v972 = vpop.xlane.xlu0 %971
        %v973 = vsub.f32 %v968, %v972
        %v974 = vmul.f32 %v973, 1.442695
        %v975 = vpow.pop %v974
        %v976 = vsel %vm969, %v975, 0.0
        %977 = vadd.xlane.f32.xlu0 %v976
        %v978 = vpop.xlane.xlu0 %977
        %v979 = vrcp.pop %v978
        %v980 = vmul.f32 %v975, %v979
        %v982 = vsel %vm969, %v980, 0
        %984 = vmatprep.subr.mxu0 0.0
        %985 = vmatpush1.msra.mxu0 %v883
        %986 = vmatprep.subr.mxu0 0.0
        %987 = vmatpush1.msra.mxu0 0.0
        %988 = vmatprep.subr.mxu0 0.0
        %989 = vmatpush1.msra.mxu0 0.0
        %990 = vmatprep.subr.mxu0 0.0
        %991 = vmatpush1.msra.mxu0 0.0
        %992 = vmatprep.subr.mxu0 0.0
        %993 = vmatpush1.msra.mxu0 0.0
        %994 = vmatprep.subr.mxu0 0.0
        %995 = vmatpush1.msra.mxu0 0.0
        %996 = vmatprep.subr.mxu0 0.0
        %997 = vmatpush1.msra.mxu0 0.0
        %998 = vmatprep.subr.mxu0 0.0
        %999 = vmatpush1.msra.mxu0 0.0
        %1000 = vmatprep.subr.mxu0 0.0
        %1001 = vmatpush1.msra.mxu0 0.0
        %1002 = vmatprep.subr.mxu0 0.0
        %1003 = vmatpush1.msra.mxu0 0.0
        %1004 = vmatprep.subr.mxu0 0.0
        %1005 = vmatpush1.msra.mxu0 0.0
        %1006 = vmatprep.subr.mxu0 0.0
        %1007 = vmatpush1.msra.mxu0 0.0
        %1008 = vmatprep.subr.mxu0 0.0
        %1009 = vmatpush1.msra.mxu0 0.0
        %1010 = vmatprep.subr.mxu0 0.0
        %1011 = vmatpush1.msra.mxu0 0.0
        %1012 = vmatprep.subr.mxu0 0.0
        %1013 = vmatpush1.msra.mxu0 0.0
        %1014 = vmatprep.subr.mxu0 0.0
        %1015 = vmatpush1.msra.mxu0 0.0
        %1016 = vmatprep.subr.mxu0 0.0
        %1017 = vmatpush1.msra.mxu0 0.0
        %1018 = vmatprep.subr.mxu0 0.0
        %1019 = vmatpush1.msra.mxu0 0.0
        %1020 = vmatprep.subr.mxu0 0.0
        %1021 = vmatpush1.msra.mxu0 0.0
        %1022 = vmatprep.subr.mxu0 0.0
        %1023 = vmatpush1.msra.mxu0 0.0
        %1024 = vmatprep.subr.mxu0 0.0
        %1025 = vmatpush1.msra.mxu0 0.0
        %1026 = vmatprep.subr.mxu0 0.0
        %1027 = vmatpush1.msra.mxu0 0.0
        %1028 = vmatprep.subr.mxu0 0.0
        %1029 = vmatpush1.msra.mxu0 0.0
        %1030 = vmatprep.subr.mxu0 0.0
        %1031 = vmatpush1.msra.mxu0 0.0
        %1032 = vmatprep.subr.mxu0 0.0
        %1033 = vmatpush1.msra.mxu0 0.0
        %1034 = vmatprep.subr.mxu0 0.0
        %1035 = vmatpush1.msra.mxu0 0.0
        %1036 = vmatprep.subr.mxu0 0.0
        %1037 = vmatpush1.msra.mxu0 0.0
        %1038 = vmatprep.subr.mxu0 0.0
        %1039 = vmatpush1.msra.mxu0 0.0
        %1040 = vmatprep.subr.mxu0 0.0
        %1041 = vmatpush1.msra.mxu0 0.0
        %1042 = vmatprep.subr.mxu0 0.0
        %1043 = vmatpush1.msra.mxu0 0.0
        %1044 = vmatprep.subr.mxu0 0.0
        %1045 = vmatpush1.msra.mxu0 0.0
        %1046 = vmatprep.subr.mxu0 0.0
        %1047 = vmatpush1.msra.mxu0 0.0
        %1048 = vmatprep.mubr.f32.mxu0 0.0
        %1049 = vmatmul.mubr.f32.gmra.mrb[0].mxu0 %v982
        %v1050 = vpop.f32.mrb[0].mxu0
        %v1051 = vadd.f32 0.0, %v1050
        %v1052 = vpop.f32.mrb[0].mxu0
        %1053 = vdwg.mxu0
        %v1054 = vld [vmem:[#allocation10] sm:$0xff]
        %v1055 = vld [vmem:[#allocation10 + $0x8] sm:$0xff]
        %v1056 = vld [vmem:[#allocation11] sm:$0x1]
        %v1058 = vlaneseq
        %v1059 = vshrl.u32 %v1058, 7
        %v1060 = vsub.s32 0, %v1059
        %v1061 = vrot.slane %v1056, %v1060
        %v1064 = vsel %vm886, %v1051, 0
        %1066 = vmatprep.subr.mxu0 0.0
        %1067 = vmatpush1.msra.mxu0 %v1054
        %1068 = vmatprep.subr.mxu0 0.0
        %1069 = vmatpush1.msra.mxu0 %v1055
        %1070 = vmatprep.subr.mxu0 0.0
        %1071 = vmatpush1.msra.mxu0 0.0
        %1072 = vmatprep.subr.mxu0 0.0
        %1073 = vmatpush1.msra.mxu0 0.0
        %1074 = vmatprep.subr.mxu0 0.0
        %1075 = vmatpush1.msra.mxu0 0.0
        %1076 = vmatprep.subr.mxu0 0.0
        %1077 = vmatpush1.msra.mxu0 0.0
        %1078 = vmatprep.subr.mxu0 0.0
        %1079 = vmatpush1.msra.mxu0 0.0
        %1080 = vmatprep.subr.mxu0 0.0
        %1081 = vmatpush1.msra.mxu0 0.0
        %1082 = vmatprep.subr.mxu0 0.0
        %1083 = vmatpush1.msra.mxu0 0.0
        %1084 = vmatprep.subr.mxu0 0.0
        %1085 = vmatpush1.msra.mxu0 0.0
        %1086 = vmatprep.subr.mxu0 0.0
        %1087 = vmatpush1.msra.mxu0 0.0
        %1088 = vmatprep.subr.mxu0 0.0
        %1089 = vmatpush1.msra.mxu0 0.0
        %1090 = vmatprep.subr.mxu0 0.0
        %1091 = vmatpush1.msra.mxu0 0.0
        %1092 = vmatprep.subr.mxu0 0.0
        %1093 = vmatpush1.msra.mxu0 0.0
        %1094 = vmatprep.subr.mxu0 0.0
        %1095 = vmatpush1.msra.mxu0 0.0
        %1096 = vmatprep.subr.mxu0 0.0
        %1097 = vmatpush1.msra.mxu0 0.0
        %1098 = vmatprep.subr.mxu0 0.0
        %1099 = vmatpush1.msra.mxu0 0.0
        %1100 = vmatprep.subr.mxu0 0.0
        %1101 = vmatpush1.msra.mxu0 0.0
        %1102 = vmatprep.subr.mxu0 0.0
        %1103 = vmatpush1.msra.mxu0 0.0
        %1104 = vmatprep.subr.mxu0 0.0
        %1105 = vmatpush1.msra.mxu0 0.0
        %1106 = vmatprep.subr.mxu0 0.0
        %1107 = vmatpush1.msra.mxu0 0.0
        %1108 = vmatprep.subr.mxu0 0.0
        %1109 = vmatpush1.msra.mxu0 0.0
        %1110 = vmatprep.subr.mxu0 0.0
        %1111 = vmatpush1.msra.mxu0 0.0
        %1112 = vmatprep.subr.mxu0 0.0
        %1113 = vmatpush1.msra.mxu0 0.0
        %1114 = vmatprep.subr.mxu0 0.0
        %1115 = vmatpush1.msra.mxu0 0.0
        %1116 = vmatprep.subr.mxu0 0.0
        %1117 = vmatpush1.msra.mxu0 0.0
        %1118 = vmatprep.subr.mxu0 0.0
        %1119 = vmatpush1.msra.mxu0 0.0
        %1120 = vmatprep.subr.mxu0 0.0
        %1121 = vmatpush1.msra.mxu0 0.0
        %1122 = vmatprep.subr.mxu0 0.0
        %1123 = vmatpush1.msra.mxu0 0.0
        %1124 = vmatprep.subr.mxu0 0.0
        %1125 = vmatpush1.msra.mxu0 0.0
        %1126 = vmatprep.subr.mxu0 0.0
        %1127 = vmatpush1.msra.mxu0 0.0
        %1128 = vmatprep.subr.mxu0 0.0
        %1129 = vmatpush1.msra.mxu0 0.0
        %1130 = vmatprep.mubr.f32.mxu0 0.0
        %1131 = vmatmul.mubr.f32.gmra.mrb[0].mxu0 %v1064
        %v1132 = vpop.f32.mrb[0].mxu0
        %v1133 = vadd.f32 %v1061, %v1132
        %v1134 = vpop.f32.mrb[0].mxu0
        %1135 = vdwg.mxu0
        %v1136 = vld [vmem:[#allocation13] sm:$0x1]
        %v1137 = vld [vmem:[#allocation14] sm:$0x1]
        %v1138 = vsel %vm663, %v1133, 0.0
        %1139 = vadd.xlane.f32.xlu0 %v1138
        %v1140 = vpop.xlane.xlu0 %1139
        %v1141 = vrcp.pop 32.0
        %v1142 = vmul.f32 %v1140, %v1141
        %v1143 = vsub.f32 %v1133, %v1142
        %v1144 = vmul.f32 %v1143, %v1143
        %v1145 = vsel %vm663, %v1144, 0.0
        %1146 = vadd.xlane.f32.xlu0 %v1145
        %v1147 = vpop.xlane.xlu0 %1146
        %v1148 = vmul.f32 %v1147, %v1141
        %v1149 = vadd.f32 %v1148, 1e-05
        %v1150 = vrsqrt.pop %v1149
        %v1151 = vmul.f32 %v1143, %v1150
        %v1153 = vlaneseq
        %v1154 = vshrl.u32 %v1153, 7
        %v1155 = vsub.s32 0, %v1154
        %v1156 = vrot.slane %v1136, %v1155
        %v1158 = vmul.f32 %v1151, %v1156
        %v1160 = vlaneseq
        %v1161 = vshrl.u32 %v1160, 7
        %v1162 = vsub.s32 0, %v1161
        %v1163 = vrot.slane %v1137, %v1162
        %v1165 = vadd.f32 %v1158, %v1163
        %v1166 = vld [vmem:[#allocation16] sm:$0xff]
        %v1167 = vld [vmem:[#allocation16 + $0x8] sm:$0xff]
        %v1168 = vld [vmem:[#allocation16 + $0x10] sm:$0xff]
        %v1169 = vld [vmem:[#allocation16 + $0x18] sm:$0xff]
        %v1170 = vld [vmem:[#allocation17] sm:$0x1]
        %v1172 = vlaneseq
        %v1173 = vshrl.u32 %v1172, 7
        %v1174 = vsub.s32 0, %v1173
        %v1175 = vrot.slane %v1170, %v1174
        %v1178 = vsel %vm663, %v1165, 0
        %1180 = vmatprep.subr.mxu0 0.0
        %1181 = vmatpush1.msra.mxu0 %v1166
        %1182 = vmatprep.subr.mxu0 0.0
        %1183 = vmatpush1.msra.mxu0 %v1167
        %1184 = vmatprep.subr.mxu0 0.0
        %1185 = vmatpush1.msra.mxu0 %v1168
        %1186 = vmatprep.subr.mxu0 0.0
        %1187 = vmatpush1.msra.mxu0 %v1169
        %1188 = vmatprep.subr.mxu0 0.0
        %1189 = vmatpush1.msra.mxu0 0.0
        %1190 = vmatprep.subr.mxu0 0.0
        %1191 = vmatpush1.msra.mxu0 0.0
        %1192 = vmatprep.subr.mxu0 0.0
        %1193 = vmatpush1.msra.mxu0 0.0
        %1194 = vmatprep.subr.mxu0 0.0
        %1195 = vmatpush1.msra.mxu0 0.0
        %1196 = vmatprep.subr.mxu0 0.0
        %1197 = vmatpush1.msra.mxu0 0.0
        %1198 = vmatprep.subr.mxu0 0.0
        %1199 = vmatpush1.msra.mxu0 0.0
        %1200 = vmatprep.subr.mxu0 0.0
        %1201 = vmatpush1.msra.mxu0 0.0
        %1202 = vmatprep.subr.mxu0 0.0
        %1203 = vmatpush1.msra.mxu0 0.0
        %1204 = vmatprep.subr.mxu0 0.0
        %1205 = vmatpush1.msra.mxu0 0.0
        %1206 = vmatprep.subr.mxu0 0.0
        %1207 = vmatpush1.msra.mxu0 0.0
        %1208 = vmatprep.subr.mxu0 0.0
        %1209 = vmatpush1.msra.mxu0 0.0
        %1210 = vmatprep.subr.mxu0 0.0
        %1211 = vmatpush1.msra.mxu0 0.0
        %1212 = vmatprep.subr.mxu0 0.0
        %1213 = vmatpush1.msra.mxu0 0.0
        %1214 = vmatprep.subr.mxu0 0.0
        %1215 = vmatpush1.msra.mxu0 0.0
        %1216 = vmatprep.subr.mxu0 0.0
        %1217 = vmatpush1.msra.mxu0 0.0
        %1218 = vmatprep.subr.mxu0 0.0
        %1219 = vmatpush1.msra.mxu0 0.0
        %1220 = vmatprep.subr.mxu0 0.0
        %1221 = vmatpush1.msra.mxu0 0.0
        %1222 = vmatprep.subr.mxu0 0.0
        %1223 = vmatpush1.msra.mxu0 0.0
        %1224 = vmatprep.subr.mxu0 0.0
        %1225 = vmatpush1.msra.mxu0 0.0
        %1226 = vmatprep.subr.mxu0 0.0
        %1227 = vmatpush1.msra.mxu0 0.0
        %1228 = vmatprep.subr.mxu0 0.0
        %1229 = vmatpush1.msra.mxu0 0.0
        %1230 = vmatprep.subr.mxu0 0.0
        %1231 = vmatpush1.msra.mxu0 0.0
        %1232 = vmatprep.subr.mxu0 0.0
        %1233 = vmatpush1.msra.mxu0 0.0
        %1234 = vmatprep.subr.mxu0 0.0
        %1235 = vmatpush1.msra.mxu0 0.0
        %1236 = vmatprep.subr.mxu0 0.0
        %1237 = vmatpush1.msra.mxu0 0.0
        %1238 = vmatprep.subr.mxu0 0.0
        %1239 = vmatpush1.msra.mxu0 0.0
        %1240 = vmatprep.subr.mxu0 0.0
        %1241 = vmatpush1.msra.mxu0 0.0
        %1242 = vmatprep.subr.mxu0 0.0
        %1243 = vmatpush1.msra.mxu0 0.0
        %1244 = vmatprep.mubr.f32.mxu0 0.0
        %1245 = vmatmul.mubr.f32.gmra.mrb[0].mxu0 %v1178
        %v1246 = vpop.f32.mrb[0].mxu0
        %v1247 = vadd.f32 %v1175, %v1246
        %v1248 = vpop.f32.mrb[0].mxu0
        %1249 = vdwg.mxu0
        %v1250 = vmax.f32 %v1247, 0.0
        %v1251 = vld [vmem:[#allocation19] sm:$0xff]
        %v1252 = vld [vmem:[#allocation19 + $0x8] sm:$0xff]
        %v1253 = vld [vmem:[#allocation19 + $0x10] sm:$0xff]
        %v1254 = vld [vmem:[#allocation19 + $0x18] sm:$0xff]
        %v1255 = vld [vmem:[#allocation19 + $0x20] sm:$0xff]
        %v1256 = vld [vmem:[#allocation19 + $0x28] sm:$0xff]
        %v1257 = vld [vmem:[#allocation19 + $0x30] sm:$0xff]
        %v1258 = vld [vmem:[#allocation19 + $0x38] sm:$0xff]
        %v1259 = vld [vmem:[#allocation19 + $0x40] sm:$0xff]
        %v1260 = vld [vmem:[#allocation19 + $0x48] sm:$0xff]
        %v1261 = vld [vmem:[#allocation19 + $0x50] sm:$0xff]
        %v1262 = vld [vmem:[#allocation19 + $0x58] sm:$0xff]
        %v1263 = vld [vmem:[#allocation19 + $0x60] sm:$0xff]
        %v1264 = vld [vmem:[#allocation19 + $0x68] sm:$0xff]
        %v1265 = vld [vmem:[#allocation19 + $0x70] sm:$0xff]
        %v1266 = vld [vmem:[#allocation19 + $0x78] sm:$0xff]
        %v1267 = vld [vmem:[#allocation20] sm:$0x1]
        %v1269 = vlaneseq
        %v1270 = vshrl.u32 %v1269, 7
        %v1271 = vsub.s32 0, %v1270
        %v1272 = vrot.slane %v1267, %v1271
        %1274 = vmatprep.subr.mxu0 0.0
        %1275 = vmatpush1.msra.mxu0 %v1251
        %1276 = vmatprep.subr.mxu0 0.0
        %1277 = vmatpush1.msra.mxu0 %v1252
        %1278 = vmatprep.subr.mxu0 0.0
        %1279 = vmatpush1.msra.mxu0 %v1253
        %1280 = vmatprep.subr.mxu0 0.0
        %1281 = vmatpush1.msra.mxu0 %v1254
        %1282 = vmatprep.subr.mxu0 0.0
        %1283 = vmatpush1.msra.mxu0 %v1255
        %1284 = vmatprep.subr.mxu0 0.0
        %1285 = vmatpush1.msra.mxu0 %v1256
        %1286 = vmatprep.subr.mxu0 0.0
        %1287 = vmatpush1.msra.mxu0 %v1257
        %1288 = vmatprep.subr.mxu0 0.0
        %1289 = vmatpush1.msra.mxu0 %v1258
        %1290 = vmatprep.subr.mxu0 0.0
        %1291 = vmatpush1.msra.mxu0 %v1259
        %1292 = vmatprep.subr.mxu0 0.0
        %1293 = vmatpush1.msra.mxu0 %v1260
        %1294 = vmatprep.subr.mxu0 0.0
        %1295 = vmatpush1.msra.mxu0 %v1261
        %1296 = vmatprep.subr.mxu0 0.0
        %1297 = vmatpush1.msra.mxu0 %v1262
        %1298 = vmatprep.subr.mxu0 0.0
        %1299 = vmatpush1.msra.mxu0 %v1263
        %1300 = vmatprep.subr.mxu0 0.0
        %1301 = vmatpush1.msra.mxu0 %v1264
        %1302 = vmatprep.subr.mxu0 0.0
        %1303 = vmatpush1.msra.mxu0 %v1265
        %1304 = vmatprep.subr.mxu0 0.0
        %1305 = vmatpush1.msra.mxu0 %v1266
        %1306 = vmatprep.subr.mxu0 0.0
        %1307 = vmatpush1.msra.mxu0 0.0
        %1308 = vmatprep.subr.mxu0 0.0
        %1309 = vmatpush1.msra.mxu0 0.0
        %1310 = vmatprep.subr.mxu0 0.0
        %1311 = vmatpush1.msra.mxu0 0.0
        %1312 = vmatprep.subr.mxu0 0.0
        %1313 = vmatpush1.msra.mxu0 0.0
        %1314 = vmatprep.subr.mxu0 0.0
        %1315 = vmatpush1.msra.mxu0 0.0
        %1316 = vmatprep.subr.mxu0 0.0
        %1317 = vmatpush1.msra.mxu0 0.0
        %1318 = vmatprep.subr.mxu0 0.0
        %1319 = vmatpush1.msra.mxu0 0.0
        %1320 = vmatprep.subr.mxu0 0.0
        %1321 = vmatpush1.msra.mxu0 0.0
        %1322 = vmatprep.subr.mxu0 0.0
        %1323 = vmatpush1.msra.mxu0 0.0
        %1324 = vmatprep.subr.mxu0 0.0
        %1325 = vmatpush1.msra.mxu0 0.0
        %1326 = vmatprep.subr.mxu0 0.0
        %1327 = vmatpush1.msra.mxu0 0.0
        %1328 = vmatprep.subr.mxu0 0.0
        %1329 = vmatpush1.msra.mxu0 0.0
        %1330 = vmatprep.subr.mxu0 0.0
        %1331 = vmatpush1.msra.mxu0 0.0
        %1332 = vmatprep.subr.mxu0 0.0
        %1333 = vmatpush1.msra.mxu0 0.0
        %1334 = vmatprep.subr.mxu0 0.0
        %1335 = vmatpush1.msra.mxu0 0.0
        %1336 = vmatprep.subr.mxu0 0.0
        %1337 = vmatpush1.msra.mxu0 0.0
        %1338 = vmatprep.mubr.f32.mxu0 0.0
        %1339 = vmatmul.mubr.f32.gmra.mrb[0].mxu0 %v1250
        %v1340 = vpop.f32.mrb[0].mxu0
        %v1341 = vadd.f32 %v1272, %v1340
        %v1342 = vpop.f32.mrb[0].mxu0
        %1343 = vdwg.mxu0
        %v1344 = vld [vmem:[#allocation22] sm:$0x1]
        %v1345 = vld [vmem:[#allocation23] sm:$0x1]
        %v1346 = vsel %vm663, %v1341, 0.0
        %1347 = vadd.xlane.f32.xlu0 %v1346
        %v1348 = vpop.xlane.xlu0 %1347
        %v1349 = vmul.f32 %v1348, %v1141
        %v1350 = vsub.f32 %v1341, %v1349
        %v1351 = vmul.f32 %v1350, %v1350
        %v1352 = vsel %vm663, %v1351, 0.0
        %1353 = vadd.xlane.f32.xlu0 %v1352
        %v1354 = vpop.xlane.xlu0 %1353
        %v1355 = vmul.f32 %v1354, %v1141
        %v1356 = vadd.f32 %v1355, 1e-05
        %v1357 = vrsqrt.pop %v1356
        %v1358 = vmul.f32 %v1350, %v1357
        %v1360 = vlaneseq
        %v1361 = vshrl.u32 %v1360, 7
        %v1362 = vsub.s32 0, %v1361
        %v1363 = vrot.slane %v1344, %v1362
        %v1365 = vmul.f32 %v1358, %v1363
        %v1367 = vlaneseq
        %v1368 = vshrl.u32 %v1367, 7
        %v1369 = vsub.s32 0, %v1368
        %v1370 = vrot.slane %v1345, %v1369
        %v1372 = vadd.f32 %v1365, %v1370
        %1373 = vst.msk [vmem:[%s657] sm:$0xff] %vm663, %v1372
        %s1374 = sand.u32 %s345, 1
        %s1375 = scalar_lea.sflag [#allocation4], %s1374
        %s1376 = sand.u32 %s345, 1
        %s1377 = smul.addr %s1376, 8
        %s1378 = scalar_lea.vmem [#allocation25], %s1377
        // Predicated region
        $region133: #{gpt_forward.2} parent=75 // pred_check
          %p1379 = pneg %p355
        $region134: #{gpt_forward.2} parent=75 // pred_check_branch
          %1381 = sbr.rel (%p1379) target = $region136
        $region135: #{gpt_forward.2} parent=75 // pred_region
          %s1383 = ssub.s32 128, 128
          %1384 = vsyncadd %s1375, %s1383
          %s1385 = smul.addr %s38, 128
          %s1386 = scalar_lea.hbm %s14, %s1385
          %s1388 = sshll.u32 %s1378, 4
          %s1389 = int_to_ptr.vmem [resolvable:$true] %s1388
          %1391 = dma.vmem_to_hbm [thread:$0]  %s1389, 128, %s1386, %s1375
        $region136: #{gpt_forward.2} parent=75 // pred_fallthru
          _
      $region76: #{gpt_forward.2} parent=5 // pred_fallthru
        _
      %p1392 = scmp.le.s32.totalorder 2, %s33
      // Predicated region
      $region137: #{gpt_forward.2} parent=5 // pred_check
        %p1393 = pneg %p1392
      $region138: #{gpt_forward.2} parent=5 // pred_check_branch
        %1395 = sbr.rel (%p1393) target = $region140
      $region139: #{gpt_forward.2} parent=5 // pred_region
        %s1396 = ssub.s32 %s33, 2
        // Predicated region
        $region141: #{gpt_forward.2} parent=139 // pred_check
          %p1397 = pneg %p361
        $region142: #{gpt_forward.2} parent=139 // pred_check_branch
          %1399 = sbr.rel (%p1397) target = $region144
        $region143: #{gpt_forward.2} parent=139 // pred_region
          %s1400 = sand.u32 %s346, 1
          %s1401 = scalar_lea.sflag [#allocation4], %s1400
          %s1402 = sand.u32 %s346, 1
          %s1403 = smul.addr %s1402, 8
          %s1404 = scalar_lea.vmem [#allocation25], %s1403
          %1405 = dma.done %s1401, 128
        $region144: #{gpt_forward.2} parent=139 // pred_fallthru
          _
      $region140: #{gpt_forward.2} parent=5 // pred_fallthru
        _
    $region6: #{gpt_forward.2} parent=1 // loop_footer
      %s37 = sadd.s32 1, %s33
    $region7: #{gpt_forward.2} parent=1 // loop_footer_branch
      %32 = sbr.rel target = $region3
    $region8: #{gpt_forward.2} parent=1 // loop_exit
      _
    %1406 = vsyncpa [#allocation3], 1
    %s1407 = scalar_lea.sflag [#allocation3], 1
    %1408 = vsyncpa %s1407, 1
    %1409 = vsyncpa [#allocation6], 1
    %1410 = vsyncpa [#allocation9], 1
    %1411 = vsyncpa [#allocation12], 1
    %1412 = vsyncpa [#allocation15], 1
    %1413 = vsyncpa [#allocation18], 1
    %1414 = vsyncpa [#allocation21], 1
    %1415 = vsyncpa [#allocation24], 1
    %1416 = vsyncpa [#allocation4], 1
    %s1417 = scalar_lea.sflag [#allocation4], 1
    %1418 = vsyncpa %s1417, 1

</llo_original>
